<compile_context>
chip_gen: v7x
topology: tpu7x:2x2x1
jax: 0.10.0
libtpu: 0.0.40
codegen_flags: <defaults>
</compile_context>

<pallas_src>
import jax
import jax.numpy as jnp
import numpy as np
from jax import lax
from jax.experimental import pallas as pl
from jax.experimental.pallas import tpu as pltpu


def _round_up(v, m):
    return ((v + m - 1) // m) * m


def _make_kernel(n_frames, fold, use_slices):
    """Kernel over one HW tile: full temporal shift + 1x1 conv for all T frames."""

    def kernel(x_ref, w_ref, b_ref, o_ref):
        # x_ref: (T, C, HWT)   w_ref: (C_out, C)   b_ref: (C_out, 1) f32
        # o_ref: (T, C_out, HWT)
        c, hwt = x_ref.shape[1], x_ref.shape[2]
        c_out = o_ref.shape[1]
        rest = c - 2 * fold

        w = w_ref[...]                                   # resident across frames
        # Hoist the (C_out,1)->(C_out,HWT) lane broadcast out of the frame loop
        # (JAX does not CSE broadcast_in_dim; it would be re-emitted T times).
        b_full = jnp.broadcast_to(b_ref[...], (c_out, hwt))

        if fold > 0 and not use_slices:
            # (C, 1) masks broadcast over lanes inside jnp.where -> a few vregs
            # instead of hundreds of (C, HWT) mask vregs.
            chan = lax.broadcasted_iota(jnp.int32, (c, 1), 0)
            m_next = chan < fold
            m_prev = jnp.logical_and(chan >= fold, chan < 2 * fold)

        zero_fold = (jnp.zeros((fold, hwt), dtype=x_ref.dtype)
                     if (fold > 0 and use_slices) else None)

        # T (= n_segment) is small; fully unrolled static loop.
        # TODO(synk): for very large n_segment (T >= 16) peel frames 0 / T-1 and
        # run the interior with lax.fori_loop to bound vreg live ranges.
        for j in range(n_frames):
            if fold == 0:
                shifted = x_ref[j]
            elif use_slices:
                # Exactly C*HWT loads: three sublane-aligned channel slices.
                nxt = x_ref[j + 1, :fold, :] if j + 1 < n_frames else zero_fold
                prv = x_ref[j - 1, fold:2 * fold, :] if j > 0 else zero_fold
                pieces = [nxt, prv]
                if rest > 0:
                    pieces.append(x_ref[j, 2 * fold:, :])
                shifted = jnp.concatenate(pieces, axis=0)
            else:
                # Fallback (fold not sublane-pack aligned): masked select with
                # (C,1) masks; boundaries use a scalar zero, no zero tensor.
                cur = x_ref[j]
                nxt = x_ref[j + 1] if j + 1 < n_frames else 0.0
                prv = x_ref[j - 1] if j > 0 else 0.0
                shifted = jnp.where(m_next, nxt, jnp.where(m_prev, prv, cur))

            # 1x1 conv == (C_out, C) @ (C, HWT) on the MXU, f32 accumulate.
            # (default MXU precision; reference uses HIGHEST -> tolerance 1e-4)
            acc = jnp.dot(w, shifted, preferred_element_type=jnp.float32)
            o_ref[j] = (acc + b_full).astype(o_ref.dtype)

    return kernel


def temporal_shift_conv(x_nchw, conv_weight, conv_bias, fold_div=8, hw_tile=None):
    """TemporalShift.forward with net = Conv2d(C, C_out, kernel_size=1, bias=True).

    x_nchw:      (nt, C, H, W)  -- nt is the temporal axis (n_batch == 1, exactly
                                   like the PyTorch forward, which sets
                                   n_segment = x.size(0)).
    conv_weight: (C_out, C, 1, 1)
    conv_bias:   (C_out,)
    returns:     (nt, C_out, H, W)
    """
    nt, c, h, w = x_nchw.shape
    fold = c // fold_div
    c_out = conv_weight.shape[0]
    hw = h * w

    # Free reshapes only -- no HBM transpose passes.  Channels stay on the
    # sublane axis, HW on the lane axis.
    x = x_nchw.reshape(nt, c, hw)
    w_mat = conv_weight.reshape(c_out, c)
    b_col = conv_bias.reshape(c_out, 1).astype(jnp.float32)

    isz = x.dtype.itemsize
    # BlockSpec double-buffers weight/bias even though their index never moves:
    # account for both copies in the budget.
    w_bytes = 2 * (w_mat.size * w_mat.dtype.itemsize + c_out * 4)

    # Per-generation VMEM budget (~70% of physical capacity).
    try:
        cap = int(pltpu.get_tpu_info().vmem_capacity_bytes)
    except Exception:
        cap = 64 << 20   # conservative fallback (v7x-sized)
    cap = max(cap, 32 << 20)
    budget = max(int(cap * 0.70) - w_bytes - (8 << 20), 8 << 20)

    # Bytes per lane column: double-buffered input + output blocks.
    bytes_per_lane = 2 * nt * (c + c_out) * isz

    # Lane-dense HW: pad to a multiple of 128 so output stores are unmasked.
    hw128 = _round_up(hw, 128)

    if hw_tile is None:
        max_tile = max((budget // bytes_per_lane) // 128 * 128, 128)
        # Aim for >= 4 tiles (even count) so DMA/compute overlap exists and both
        # v7x TensorCores get work; never below 128 lanes per tile.
        want_tiles = max(4, pl.cdiv(hw128, max_tile))
        want_tiles = min(want_tiles, hw128 // 128)
        if want_tiles > 1 and want_tiles % 2 == 1:
            want_tiles += 1
        want_tiles = max(want_tiles, 1)
        hw_tile = _round_up(pl.cdiv(hw128, want_tiles), 128)
        hw_tile = max(min(hw_tile, max_tile), 128)
    else:
        hw_tile = max(_round_up(hw_tile, 128), 128)

    n_tiles = pl.cdiv(hw128, hw_tile)
    hw_padded = n_tiles * hw_tile
    if hw_padded != hw:
        x = jnp.pad(x, ((0, 0), (0, 0), (0, hw_padded - hw)))

    needed = hw_tile * bytes_per_lane + w_bytes
    vmem_limit = int(min(cap, max(needed + (8 << 20), 32 << 20)))

    # Slice-based shift assembly needs the fold boundaries sublane-pack aligned
    # (8 rows f32, 16 rows bf16, 32 rows int8); otherwise masked-select fallback.
    pack = 8 * (4 // isz) if isz in (1, 2, 4) else 8
    use_slices = (fold > 0) and (fold % pack == 0) and (c % pack == 0)

    kernel = _make_kernel(nt, fold, use_slices)

    out = pl.pallas_call(
        kernel,
        out_shape=jax.ShapeDtypeStruct((nt, c_out, hw_padded), x.dtype),
        grid_spec=pltpu.PrefetchScalarGridSpec(
            num_scalar_prefetch=0,
            grid=(n_tiles,),
            in_specs=[
                # Full T x full C x one HW tile: every input byte DMA'd once.
                pl.BlockSpec((nt, c, hw_tile), lambda i: (0, 0, i)),
                # Conv weight / bias, resident across the grid (block index fixed).
                # TODO(synk): pipeline_mode=pl.Buffered(1) would drop the second
                # buffer copy; kept at the default for lowering robustness and
                # the second copy is accounted for in the VMEM estimate instead.
                pl.BlockSpec((c_out, c), lambda i: (0, 0)),
                pl.BlockSpec((c_out, 1), lambda i: (0, 0)),
            ],
            out_specs=pl.BlockSpec((nt, c_out, hw_tile), lambda i: (0, 0, i)),
        ),
        compiler_params=pltpu.CompilerParams(
            dimension_semantics=("parallel",),   # HW tiles are independent
            vmem_limit_bytes=vmem_limit,
        ),
    )(x, w_mat, b_col)

    if hw_padded != hw:
        out = out[:, :, :hw]
    return out.reshape(nt, c_out, h, w)


def _reference(x_nchw, conv_weight, conv_bias, fold_div=8):
    """Pure-JAX reference mirroring the PyTorch code (shift then 1x1 conv)."""
    nt, c, h, w = x_nchw.shape
    fold = c // fold_div
    out = jnp.zeros_like(x_nchw)
    out = out.at[:-1, :fold].set(x_nchw[1:, :fold])
    out = out.at[1:, fold:2 * fold].set(x_nchw[:-1, fold:2 * fold])
    out = out.at[:, 2 * fold:].set(x_nchw[:, 2 * fold:])
    w2d = conv_weight.reshape(conv_weight.shape[0], c)
    y = jnp.einsum('oc,tchw->tohw', w2d, out, precision=lax.Precision.HIGHEST)
    return y + conv_bias[None, :, None, None]


# TODO(synk): prune/concat/inplace branches of TemporalShift are disabled in the
# default config (prune=False, concat=False, inplace=False) and are not
# implemented here; forward pass only (no InplaceShift.backward).

if __name__ == "__main__":
    key = jax.random.PRNGKey(0)
    k_x, k_w, k_b = jax.random.split(key, 3)

    # Primary check: 8 temporal segments, 64 channels, 16x16 spatial (HW=256 ->
    # 2 lane-dense tiles, multi-step grid).
    nt, c, h, w = 8, 64, 16, 16
    c_out = 64
    fold_div = 8

    x = jax.random.normal(k_x, (nt, c, h, w), dtype=jnp.float32)
    conv_weight = jax.random.normal(k_w, (c_out, c, 1, 1), dtype=jnp.float32) * 0.05
    conv_bias = jax.random.normal(k_b, (c_out,), dtype=jnp.float32) * 0.01

    y = temporal_shift_conv(x, conv_weight, conv_bias, fold_div=fold_div)
    y = jax.block_until_ready(y)
    y_ref = _reference(x, conv_weight, conv_bias, fold_div=fold_div)
    np.testing.assert_allclose(np.asarray(y), np.asarray(y_ref), rtol=1e-4, atol=1e-4)

    # Secondary check: non-128-multiple spatial extent (real TSM 7x7 -> HW=49)
    # exercises the lane-padding path.
    x2 = jax.random.normal(k_x, (nt, c, 7, 7), dtype=jnp.float32)
    y2 = temporal_shift_conv(x2, conv_weight, conv_bias, fold_div=fold_div)
    y2 = jax.block_until_ready(y2)
    y2_ref = _reference(x2, conv_weight, conv_bias, fold_div=fold_div)
    np.testing.assert_allclose(np.asarray(y2), np.asarray(y2_ref), rtol=1e-4, atol=1e-4)

    print("KERNEL_OK")
</pallas_src>

<mosaic_0001>
module attributes {stable_mosaic.version = 11 : i64} {
  func.func @kernel(%arg0: i32, %arg1: memref<8x64x128xf32, #tpu.memory_space<vmem>>, %arg2: memref<64x64xf32, #tpu.memory_space<vmem>>, %arg3: memref<64x1xf32, #tpu.memory_space<vmem>>, %arg4: memref<8x64x128xf32, #tpu.memory_space<vmem>>) attributes {dimension_semantics = [#tpu.dimension_semantics<parallel>], iteration_bounds = array<i64: 2>, scalar_prefetch = 0 : i64, scratch_operands = 0 : i64, tpu.core_type = #tpu.core_type<tc>, window_params = [{transform_indices = @transform_0, window_bounds = array<i64: 8, 64, 128>}, {pipeline_mode = #tpu.pipeline_mode<synchronous>, transform_indices = @transform_1, window_bounds = array<i64: 64, 64>}, {pipeline_mode = #tpu.pipeline_mode<synchronous>, transform_indices = @transform_2, window_bounds = array<i64: 64, 1>}, {transform_indices = @transform_3, window_bounds = array<i64: 8, 64, 128>}]} {
    %c0 = arith.constant 0 : index
    %c0_0 = arith.constant 0 : index
    %0 = vector.load %arg2[%c0, %c0_0] : memref<64x64xf32, #tpu.memory_space<vmem>>, vector<64x64xf32>
    %c0_1 = arith.constant 0 : index
    %c0_2 = arith.constant 0 : index
    %1 = vector.load %arg3[%c0_1, %c0_2] : memref<64x1xf32, #tpu.memory_space<vmem>>, vector<64x1xf32>
    %2 = vector.shape_cast %1 : vector<64x1xf32> to vector<64x1xf32>
    %3 = vector.broadcast %2 : vector<64x1xf32> to vector<64x128xf32>
    %cst = arith.constant 0.000000e+00 : f32
    %4 = vector.broadcast %cst : f32 to vector<8x128xf32>
    %c1 = arith.constant 1 : index
    %c0_3 = arith.constant 0 : index
    %c0_4 = arith.constant 0 : index
    %5 = vector.load %arg1[%c1, %c0_3, %c0_4] : memref<8x64x128xf32, #tpu.memory_space<vmem>>, vector<1x8x128xf32>
    %6 = vector.shape_cast %5 : vector<1x8x128xf32> to vector<8x128xf32>
    %c0_5 = arith.constant 0 : index
    %c16 = arith.constant 16 : index
    %c0_6 = arith.constant 0 : index
    %7 = vector.load %arg1[%c0_5, %c16, %c0_6] : memref<8x64x128xf32, #tpu.memory_space<vmem>>, vector<1x48x128xf32>
    %8 = vector.shape_cast %7 : vector<1x48x128xf32> to vector<48x128xf32>
    %9 = tpu.concatenate %6, %4, %8 in 0 : vector<8x128xf32>, vector<8x128xf32>, vector<48x128xf32> -> vector<64x128xf32>
    %cst_7 = arith.constant dense<0.000000e+00> : vector<64x128xf32>
    %10 = tpu.matmul %0, %9, %cst_7 {dimension_numbers = #tpu.dot_dimension_numbers<[1], [0], [0], [1], [0, 0, 1, 1], [], []>} : vector<64x64xf32>, vector<64x128xf32>, vector<64x128xf32> -> vector<64x128xf32>
    %11 = arith.addf %10, %3 : vector<64x128xf32>
    %c0_8 = arith.constant 0 : index
    %c0_9 = arith.constant 0 : index
    %c0_10 = arith.constant 0 : index
    %12 = vector.load %arg4[%c0_8, %c0_9, %c0_10] : memref<8x64x128xf32, #tpu.memory_space<vmem>>, vector<1x64x128xf32>
    %13 = vector.shape_cast %12 : vector<1x64x128xf32> to vector<64x128xf32>
    %14 = vector.shape_cast %11 : vector<64x128xf32> to vector<1x64x128xf32>
    tpu.vector_store %arg4[%c0_8, %c0_9, %c0_10], %14 {strides = array<i32>} : memref<8x64x128xf32, #tpu.memory_space<vmem>>, vector<1x64x128xf32>,
    %c2 = arith.constant 2 : index
    %c0_11 = arith.constant 0 : index
    %c0_12 = arith.constant 0 : index
    %15 = vector.load %arg1[%c2, %c0_11, %c0_12] : memref<8x64x128xf32, #tpu.memory_space<vmem>>, vector<1x8x128xf32>
    %16 = vector.shape_cast %15 : vector<1x8x128xf32> to vector<8x128xf32>
    %c0_13 = arith.constant 0 : index
    %c8 = arith.constant 8 : index
    %c0_14 = arith.constant 0 : index
    %17 = vector.load %arg1[%c0_13, %c8, %c0_14] : memref<8x64x128xf32, #tpu.memory_space<vmem>>, vector<1x8x128xf32>
    %18 = vector.shape_cast %17 : vector<1x8x128xf32> to vector<8x128xf32>
    %c1_15 = arith.constant 1 : index
    %c16_16 = arith.constant 16 : index
    %c0_17 = arith.constant 0 : index
    %19 = vector.load %arg1[%c1_15, %c16_16, %c0_17] : memref<8x64x128xf32, #tpu.memory_space<vmem>>, vector<1x48x128xf32>
    %20 = vector.shape_cast %19 : vector<1x48x128xf32> to vector<48x128xf32>
    %21 = tpu.concatenate %16, %18, %20 in 0 : vector<8x128xf32>, vector<8x128xf32>, vector<48x128xf32> -> vector<64x128xf32>
    %cst_18 = arith.constant dense<0.000000e+00> : vector<64x128xf32>
    %22 = tpu.matmul %0, %21, %cst_18 {dimension_numbers = #tpu.dot_dimension_numbers<[1], [0], [0], [1], [0, 0, 1, 1], [], []>} : vector<64x64xf32>, vector<64x128xf32>, vector<64x128xf32> -> vector<64x128xf32>
    %23 = arith.addf %22, %3 : vector<64x128xf32>
    %c1_19 = arith.constant 1 : index
    %c0_20 = arith.constant 0 : index
    %c0_21 = arith.constant 0 : index
    %24 = vector.load %arg4[%c1_19, %c0_20, %c0_21] : memref<8x64x128xf32, #tpu.memory_space<vmem>>, vector<1x64x128xf32>
    %25 = vector.shape_cast %24 : vector<1x64x128xf32> to vector<64x128xf32>
    %26 = vector.shape_cast %23 : vector<64x128xf32> to vector<1x64x128xf32>
    tpu.vector_store %arg4[%c1_19, %c0_20, %c0_21], %26 {strides = array<i32>} : memref<8x64x128xf32, #tpu.memory_space<vmem>>, vector<1x64x128xf32>,
    %c3 = arith.constant 3 : index
    %c0_22 = arith.constant 0 : index
    %c0_23 = arith.constant 0 : index
    %27 = vector.load %arg1[%c3, %c0_22, %c0_23] : memref<8x64x128xf32, #tpu.memory_space<vmem>>, vector<1x8x128xf32>
    %28 = vector.shape_cast %27 : vector<1x8x128xf32> to vector<8x128xf32>
    %c1_24 = arith.constant 1 : index
    %c8_25 = arith.constant 8 : index
    %c0_26 = arith.constant 0 : index
    %29 = vector.load %arg1[%c1_24, %c8_25, %c0_26] : memref<8x64x128xf32, #tpu.memory_space<vmem>>, vector<1x8x128xf32>
    %30 = vector.shape_cast %29 : vector<1x8x128xf32> to vector<8x128xf32>
    %c2_27 = arith.constant 2 : index
    %c16_28 = arith.constant 16 : index
    %c0_29 = arith.constant 0 : index
    %31 = vector.load %arg1[%c2_27, %c16_28, %c0_29] : memref<8x64x128xf32, #tpu.memory_space<vmem>>, vector<1x48x128xf32>
    %32 = vector.shape_cast %31 : vector<1x48x128xf32> to vector<48x128xf32>
    %33 = tpu.concatenate %28, %30, %32 in 0 : vector<8x128xf32>, vector<8x128xf32>, vector<48x128xf32> -> vector<64x128xf32>
    %cst_30 = arith.constant dense<0.000000e+00> : vector<64x128xf32>
    %34 = tpu.matmul %0, %33, %cst_30 {dimension_numbers = #tpu.dot_dimension_numbers<[1], [0], [0], [1], [0, 0, 1, 1], [], []>} : vector<64x64xf32>, vector<64x128xf32>, vector<64x128xf32> -> vector<64x128xf32>
    %35 = arith.addf %34, %3 : vector<64x128xf32>
    %c2_31 = arith.constant 2 : index
    %c0_32 = arith.constant 0 : index
    %c0_33 = arith.constant 0 : index
    %36 = vector.load %arg4[%c2_31, %c0_32, %c0_33] : memref<8x64x128xf32, #tpu.memory_space<vmem>>, vector<1x64x128xf32>
    %37 = vector.shape_cast %36 : vector<1x64x128xf32> to vector<64x128xf32>
    %38 = vector.shape_cast %35 : vector<64x128xf32> to vector<1x64x128xf32>
    tpu.vector_store %arg4[%c2_31, %c0_32, %c0_33], %38 {strides = array<i32>} : memref<8x64x128xf32, #tpu.memory_space<vmem>>, vector<1x64x128xf32>,
    %c4 = arith.constant 4 : index
    %c0_34 = arith.constant 0 : index
    %c0_35 = arith.constant 0 : index
    %39 = vector.load %arg1[%c4, %c0_34, %c0_35] : memref<8x64x128xf32, #tpu.memory_space<vmem>>, vector<1x8x128xf32>
    %40 = vector.shape_cast %39 : vector<1x8x128xf32> to vector<8x128xf32>
    %c2_36 = arith.constant 2 : index
    %c8_37 = arith.constant 8 : index
    %c0_38 = arith.constant 0 : index
    %41 = vector.load %arg1[%c2_36, %c8_37, %c0_38] : memref<8x64x128xf32, #tpu.memory_space<vmem>>, vector<1x8x128xf32>
    %42 = vector.shape_cast %41 : vector<1x8x128xf32> to vector<8x128xf32>
    %c3_39 = arith.constant 3 : index
    %c16_40 = arith.constant 16 : index
    %c0_41 = arith.constant 0 : index
    %43 = vector.load %arg1[%c3_39, %c16_40, %c0_41] : memref<8x64x128xf32, #tpu.memory_space<vmem>>, vector<1x48x128xf32>
    %44 = vector.shape_cast %43 : vector<1x48x128xf32> to vector<48x128xf32>
    %45 = tpu.concatenate %40, %42, %44 in 0 : vector<8x128xf32>, vector<8x128xf32>, vector<48x128xf32> -> vector<64x128xf32>
    %cst_42 = arith.constant dense<0.000000e+00> : vector<64x128xf32>
    %46 = tpu.matmul %0, %45, %cst_42 {dimension_numbers = #tpu.dot_dimension_numbers<[1], [0], [0], [1], [0, 0, 1, 1], [], []>} : vector<64x64xf32>, vector<64x128xf32>, vector<64x128xf32> -> vector<64x128xf32>
    %47 = arith.addf %46, %3 : vector<64x128xf32>
    %c3_43 = arith.constant 3 : index
    %c0_44 = arith.constant 0 : index
    %c0_45 = arith.constant 0 : index
    %48 = vector.load %arg4[%c3_43, %c0_44, %c0_45] : memref<8x64x128xf32, #tpu.memory_space<vmem>>, vector<1x64x128xf32>
    %49 = vector.shape_cast %48 : vector<1x64x128xf32> to vector<64x128xf32>
    %50 = vector.shape_cast %47 : vector<64x128xf32> to vector<1x64x128xf32>
    tpu.vector_store %arg4[%c3_43, %c0_44, %c0_45], %50 {strides = array<i32>} : memref<8x64x128xf32, #tpu.memory_space<vmem>>, vector<1x64x128xf32>,
    %c5 = arith.constant 5 : index
    %c0_46 = arith.constant 0 : index
    %c0_47 = arith.constant 0 : index
    %51 = vector.load %arg1[%c5, %c0_46, %c0_47] : memref<8x64x128xf32, #tpu.memory_space<vmem>>, vector<1x8x128xf32>
    %52 = vector.shape_cast %51 : vector<1x8x128xf32> to vector<8x128xf32>
    %c3_48 = arith.constant 3 : index
    %c8_49 = arith.constant 8 : index
    %c0_50 = arith.constant 0 : index
    %53 = vector.load %arg1[%c3_48, %c8_49, %c0_50] : memref<8x64x128xf32, #tpu.memory_space<vmem>>, vector<1x8x128xf32>
    %54 = vector.shape_cast %53 : vector<1x8x128xf32> to vector<8x128xf32>
    %c4_51 = arith.constant 4 : index
    %c16_52 = arith.constant 16 : index
    %c0_53 = arith.constant 0 : index
    %55 = vector.load %arg1[%c4_51, %c16_52, %c0_53] : memref<8x64x128xf32, #tpu.memory_space<vmem>>, vector<1x48x128xf32>
    %56 = vector.shape_cast %55 : vector<1x48x128xf32> to vector<48x128xf32>
    %57 = tpu.concatenate %52, %54, %56 in 0 : vector<8x128xf32>, vector<8x128xf32>, vector<48x128xf32> -> vector<64x128xf32>
    %cst_54 = arith.constant dense<0.000000e+00> : vector<64x128xf32>
    %58 = tpu.matmul %0, %57, %cst_54 {dimension_numbers = #tpu.dot_dimension_numbers<[1], [0], [0], [1], [0, 0, 1, 1], [], []>} : vector<64x64xf32>, vector<64x128xf32>, vector<64x128xf32> -> vector<64x128xf32>
    %59 = arith.addf %58, %3 : vector<64x128xf32>
    %c4_55 = arith.constant 4 : index
    %c0_56 = arith.constant 0 : index
    %c0_57 = arith.constant 0 : index
    %60 = vector.load %arg4[%c4_55, %c0_56, %c0_57] : memref<8x64x128xf32, #tpu.memory_space<vmem>>, vector<1x64x128xf32>
    %61 = vector.shape_cast %60 : vector<1x64x128xf32> to vector<64x128xf32>
    %62 = vector.shape_cast %59 : vector<64x128xf32> to vector<1x64x128xf32>
    tpu.vector_store %arg4[%c4_55, %c0_56, %c0_57], %62 {strides = array<i32>} : memref<8x64x128xf32, #tpu.memory_space<vmem>>, vector<1x64x128xf32>,
    %c6 = arith.constant 6 : index
    %c0_58 = arith.constant 0 : index
    %c0_59 = arith.constant 0 : index
    %63 = vector.load %arg1[%c6, %c0_58, %c0_59] : memref<8x64x128xf32, #tpu.memory_space<vmem>>, vector<1x8x128xf32>
    %64 = vector.shape_cast %63 : vector<1x8x128xf32> to vector<8x128xf32>
    %c4_60 = arith.constant 4 : index
    %c8_61 = arith.constant 8 : index
    %c0_62 = arith.constant 0 : index
    %65 = vector.load %arg1[%c4_60, %c8_61, %c0_62] : memref<8x64x128xf32, #tpu.memory_space<vmem>>, vector<1x8x128xf32>
    %66 = vector.shape_cast %65 : vector<1x8x128xf32> to vector<8x128xf32>
    %c5_63 = arith.constant 5 : index
    %c16_64 = arith.constant 16 : index
    %c0_65 = arith.constant 0 : index
    %67 = vector.load %arg1[%c5_63, %c16_64, %c0_65] : memref<8x64x128xf32, #tpu.memory_space<vmem>>, vector<1x48x128xf32>
    %68 = vector.shape_cast %67 : vector<1x48x128xf32> to vector<48x128xf32>
    %69 = tpu.concatenate %64, %66, %68 in 0 : vector<8x128xf32>, vector<8x128xf32>, vector<48x128xf32> -> vector<64x128xf32>
    %cst_66 = arith.constant dense<0.000000e+00> : vector<64x128xf32>
    %70 = tpu.matmul %0, %69, %cst_66 {dimension_numbers = #tpu.dot_dimension_numbers<[1], [0], [0], [1], [0, 0, 1, 1], [], []>} : vector<64x64xf32>, vector<64x128xf32>, vector<64x128xf32> -> vector<64x128xf32>
    %71 = arith.addf %70, %3 : vector<64x128xf32>
    %c5_67 = arith.constant 5 : index
    %c0_68 = arith.constant 0 : index
    %c0_69 = arith.constant 0 : index
    %72 = vector.load %arg4[%c5_67, %c0_68, %c0_69] : memref<8x64x128xf32, #tpu.memory_space<vmem>>, vector<1x64x128xf32>
    %73 = vector.shape_cast %72 : vector<1x64x128xf32> to vector<64x128xf32>
    %74 = vector.shape_cast %71 : vector<64x128xf32> to vector<1x64x128xf32>
    tpu.vector_store %arg4[%c5_67, %c0_68, %c0_69], %74 {strides = array<i32>} : memref<8x64x128xf32, #tpu.memory_space<vmem>>, vector<1x64x128xf32>,
    %c7 = arith.constant 7 : index
    %c0_70 = arith.constant 0 : index
    %c0_71 = arith.constant 0 : index
    %75 = vector.load %arg1[%c7, %c0_70, %c0_71] : memref<8x64x128xf32, #tpu.memory_space<vmem>>, vector<1x8x128xf32>
    %76 = vector.shape_cast %75 : vector<1x8x128xf32> to vector<8x128xf32>
    %c5_72 = arith.constant 5 : index
    %c8_73 = arith.constant 8 : index
    %c0_74 = arith.constant 0 : index
    %77 = vector.load %arg1[%c5_72, %c8_73, %c0_74] : memref<8x64x128xf32, #tpu.memory_space<vmem>>, vector<1x8x128xf32>
    %78 = vector.shape_cast %77 : vector<1x8x128xf32> to vector<8x128xf32>
    %c6_75 = arith.constant 6 : index
    %c16_76 = arith.constant 16 : index
    %c0_77 = arith.constant 0 : index
    %79 = vector.load %arg1[%c6_75, %c16_76, %c0_77] : memref<8x64x128xf32, #tpu.memory_space<vmem>>, vector<1x48x128xf32>
    %80 = vector.shape_cast %79 : vector<1x48x128xf32> to vector<48x128xf32>
    %81 = tpu.concatenate %76, %78, %80 in 0 : vector<8x128xf32>, vector<8x128xf32>, vector<48x128xf32> -> vector<64x128xf32>
    %cst_78 = arith.constant dense<0.000000e+00> : vector<64x128xf32>
    %82 = tpu.matmul %0, %81, %cst_78 {dimension_numbers = #tpu.dot_dimension_numbers<[1], [0], [0], [1], [0, 0, 1, 1], [], []>} : vector<64x64xf32>, vector<64x128xf32>, vector<64x128xf32> -> vector<64x128xf32>
    %83 = arith.addf %82, %3 : vector<64x128xf32>
    %c6_79 = arith.constant 6 : index
    %c0_80 = arith.constant 0 : index
    %c0_81 = arith.constant 0 : index
    %84 = vector.load %arg4[%c6_79, %c0_80, %c0_81] : memref<8x64x128xf32, #tpu.memory_space<vmem>>, vector<1x64x128xf32>
    %85 = vector.shape_cast %84 : vector<1x64x128xf32> to vector<64x128xf32>
    %86 = vector.shape_cast %83 : vector<64x128xf32> to vector<1x64x128xf32>
    tpu.vector_store %arg4[%c6_79, %c0_80, %c0_81], %86 {strides = array<i32>} : memref<8x64x128xf32, #tpu.memory_space<vmem>>, vector<1x64x128xf32>,
    %c6_82 = arith.constant 6 : index
    %c8_83 = arith.constant 8 : index
    %c0_84 = arith.constant 0 : index
    %87 = vector.load %arg1[%c6_82, %c8_83, %c0_84] : memref<8x64x128xf32, #tpu.memory_space<vmem>>, vector<1x8x128xf32>
    %88 = vector.shape_cast %87 : vector<1x8x128xf32> to vector<8x128xf32>
    %c7_85 = arith.constant 7 : index
    %c16_86 = arith.constant 16 : index
    %c0_87 = arith.constant 0 : index
    %89 = vector.load %arg1[%c7_85, %c16_86, %c0_87] : memref<8x64x128xf32, #tpu.memory_space<vmem>>, vector<1x48x128xf32>
    %90 = vector.shape_cast %89 : vector<1x48x128xf32> to vector<48x128xf32>
    %91 = tpu.concatenate %4, %88, %90 in 0 : vector<8x128xf32>, vector<8x128xf32>, vector<48x128xf32> -> vector<64x128xf32>
    %cst_88 = arith.constant dense<0.000000e+00> : vector<64x128xf32>
    %92 = tpu.matmul %0, %91, %cst_88 {dimension_numbers = #tpu.dot_dimension_numbers<[1], [0], [0], [1], [0, 0, 1, 1], [], []>} : vector<64x64xf32>, vector<64x128xf32>, vector<64x128xf32> -> vector<64x128xf32>
    %93 = arith.addf %92, %3 : vector<64x128xf32>
    %c7_89 = arith.constant 7 : index
    %c0_90 = arith.constant 0 : index
    %c0_91 = arith.constant 0 : index
    %94 = vector.load %arg4[%c7_89, %c0_90, %c0_91] : memref<8x64x128xf32, #tpu.memory_space<vmem>>, vector<1x64x128xf32>
    %95 = vector.shape_cast %94 : vector<1x64x128xf32> to vector<64x128xf32>
    %96 = vector.shape_cast %93 : vector<64x128xf32> to vector<1x64x128xf32>
    tpu.vector_store %arg4[%c7_89, %c0_90, %c0_91], %96 {strides = array<i32>} : memref<8x64x128xf32, #tpu.memory_space<vmem>>, vector<1x64x128xf32>,
    return
  }
  func.func @transform_0(%arg0: i32) -> (i32, i32, i32) {
    %c0_i32 = arith.constant 0 : i32
    %c0_i32_0 = arith.constant 0 : i32
    %c0_i32_1 = arith.constant 0 : i32
    return %c0_i32, %c0_i32_0, %arg0 : i32, i32, i32
  }
  func.func @transform_1(%arg0: i32) -> (i32, i32) {
    %c0_i32 = arith.constant 0 : i32
    %c0_i32_0 = arith.constant 0 : i32
    %c0_i32_1 = arith.constant 0 : i32
    return %c0_i32, %c0_i32_0 : i32, i32
  }
  func.func @transform_2(%arg0: i32) -> (i32, i32) {
    %c0_i32 = arith.constant 0 : i32
    %c0_i32_0 = arith.constant 0 : i32
    %c0_i32_1 = arith.constant 0 : i32
    return %c0_i32, %c0_i32_0 : i32, i32
  }
  func.func @transform_3(%arg0: i32) -> (i32, i32, i32) {
    %c0_i32 = arith.constant 0 : i32
    %c0_i32_0 = arith.constant 0 : i32
    %c0_i32_1 = arith.constant 0 : i32
    return %c0_i32, %c0_i32_0, %arg0 : i32, i32, i32
  }
}

</mosaic_0001>

<llo_original>
// kernel: tpu_custom_call.1
$region0: #{tpu_custom_call.1}
  #allocation0 [shape = 'u32[]', space=smem, size = 0x4, offset = 0x4, fixed_abs, tag = 'smem constant byte address 0x4 - core index']
  #allocation1 [shape = 'u32[144,128]{1,0:T(1,128)}', space=vmem, size = 0x12000, scoped, tag = 'internal scratch']
  %s0 = inlined_call_operand.hbm [shape: f32[8,64,256], index: 0, kind: input, shape index: {}]
  %s1 = inlined_call_operand.vmem [shape: f32[64,64], index: 1, kind: input, shape index: {}]
  %s2 = inlined_call_operand.vmem [shape: f32[64,1], index: 2, kind: input, shape index: {}]
  %s3 = inlined_call_operand.hbm [shape: f32[8,64,256], index: 3, kind: output, shape index: {}]
  %s4 = sld [smem:[#allocation0]]
  $region49: #{tpu_custom_call.1} parent=0
    _
  %s6 = ssub.s32 1, %s4
  %s7 = scalar_select 0, %s6, %s4
  $region1: #{tpu_custom_call.1} parent=0
    #allocation2 [shape = 'u8[524288]{0}', space=vmem, size = 0x80000, scoped, tag = 'input window, operand 0']
    #allocation3 [shape = 's32[2]{0}', space=sflag, size = 0x8, scoped, tag = 'scoped memory for tpu_custom_call.1']
    #allocation4 [shape = 's32[2]{0}', space=sflag, size = 0x8, scoped, tag = 'scoped memory for tpu_custom_call.1']
    #allocation5 [shape = 'u8[524288]{0}', space=vmem, size = 0x80000, scoped, tag = 'output window, operand 0']
    %8 = vsyncpa [#allocation3], 0
    %s9 = scalar_lea.sflag [#allocation3], 1
    %10 = vsyncpa %s9, 0
    %11 = vsyncpa [#allocation4], 0
    %s12 = scalar_lea.sflag [#allocation4], 1
    %13 = vsyncpa %s12, 0
    loop: start=0, step=1, limit=4
    $region2: #{tpu_custom_call.1} parent=1 // loop_pre_header
      _
    $region3: #{tpu_custom_call.1} parent=1 // loop_header
      %s15 = sphi 0, %s19
      %p16 = scmp.ge.s32.totalorder %s15, 4
      %s25 = sphi 0, %s27
      %s28 = sphi 0, %s25
      %s29 = sphi 0, %s28
      %s45 = sphi 0, %s29
      %s49 = sphi 0, %s49
      %s51 = sphi 0, %s49
      %s52 = sphi 0, %s51
      %s66 = sphi 0, %s52
      %s70 = sphi 0, %s70
      %s72 = sphi 0, %s70
      %s73 = sphi 0, %s72
      %s87 = sphi 0, %s73
      %s93 = sphi 0, %s95
      %s96 = sphi 0, %s93
      %s97 = sphi 0, %s96
      %s113 = sphi 0, %s97
    $region4: #{tpu_custom_call.1} parent=1 // loop_header_branch
      %18 = sbr.rel (%p16) target = $region8
    $region5: #{tpu_custom_call.1} parent=1 // loop_body
      %s20 = ssub.s32 %s15, 1
      %s21 = ssub.s32 %s15, 2
      %s22 = sadd.s32 %s15, 1
      %s23 = ssub.s32 %s15, %s22
      %p24 = scmp.eq.s32.totalorder %s23, 0
      %s26 = sadd.s32 %s25, 1
      %s27 = scalar_select %p24, %s25, %s26
      %p30 = pneg %p24
      %p31 = scmp.eq.s32.totalorder %s15, 1
      %p32 = por %p30, %p31
      %p33 = scmp.ne.s32.totalorder %s25, %s28
      %p34 = scmp.eq.s32.totalorder %s15, 0
      %p35 = por %p33, %p34
      %p36 = scmp.ne.s32.totalorder %s25, %s28
      %p37 = scmp.eq.s32.totalorder %s20, 1
      %p38 = por %p36, %p37
      %p39 = scmp.ne.s32.totalorder %s28, %s29
      %p40 = scmp.eq.s32.totalorder %s20, 0
      %p41 = por %p39, %p40
      %p42 = scmp.ne.s32.totalorder %s28, %s29
      %p43 = scmp.eq.s32.totalorder %s21, 1
      %p44 = por %p42, %p43
      %p46 = scmp.ne.s32.totalorder %s29, %s45
      %p47 = scmp.eq.s32.totalorder %s21, 0
      %p48 = por %p46, %p47
      %s50 = sadd.s32 %s49, 1
      %p53 = scmp.eq.s32.totalorder %s15, 1
      %p54 = scmp.ne.s32.totalorder %s49, %s51
      %p55 = scmp.eq.s32.totalorder %s15, 0
      %p56 = por %p54, %p55
      %p57 = scmp.ne.s32.totalorder %s49, %s51
      %p58 = scmp.eq.s32.totalorder %s20, 1
      %p59 = por %p57, %p58
      %p60 = scmp.ne.s32.totalorder %s51, %s52
      %p61 = scmp.eq.s32.totalorder %s20, 0
      %p62 = por %p60, %p61
      %p63 = scmp.ne.s32.totalorder %s51, %s52
      %p64 = scmp.eq.s32.totalorder %s21, 1
      %p65 = por %p63, %p64
      %p67 = scmp.ne.s32.totalorder %s52, %s66
      %p68 = scmp.eq.s32.totalorder %s21, 0
      %p69 = por %p67, %p68
      %s71 = sadd.s32 %s70, 1
      %p74 = scmp.eq.s32.totalorder %s15, 1
      %p75 = scmp.ne.s32.totalorder %s70, %s72
      %p76 = scmp.eq.s32.totalorder %s15, 0
      %p77 = por %p75, %p76
      %p78 = scmp.ne.s32.totalorder %s70, %s72
      %p79 = scmp.eq.s32.totalorder %s20, 1
      %p80 = por %p78, %p79
      %p81 = scmp.ne.s32.totalorder %s72, %s73
      %p82 = scmp.eq.s32.totalorder %s20, 0
      %p83 = por %p81, %p82
      %p84 = scmp.ne.s32.totalorder %s72, %s73
      %p85 = scmp.eq.s32.totalorder %s21, 1
      %p86 = por %p84, %p85
      %p88 = scmp.ne.s32.totalorder %s73, %s87
      %p89 = scmp.eq.s32.totalorder %s21, 0
      %p90 = por %p88, %p89
      %s91 = ssub.s32 %s15, %s22
      %p92 = scmp.eq.s32.totalorder %s91, 0
      %s94 = sadd.s32 %s93, 1
      %s95 = scalar_select %p92, %s93, %s94
      %p98 = pneg %p92
      %p99 = scmp.eq.s32.totalorder %s15, 1
      %p100 = por %p98, %p99
      %p101 = scmp.ne.s32.totalorder %s93, %s96
      %p102 = scmp.eq.s32.totalorder %s15, 0
      %p103 = por %p101, %p102
      %p104 = scmp.ne.s32.totalorder %s93, %s96
      %p105 = scmp.eq.s32.totalorder %s20, 1
      %p106 = por %p104, %p105
      %p107 = scmp.ne.s32.totalorder %s96, %s97
      %p108 = scmp.eq.s32.totalorder %s20, 0
      %p109 = por %p107, %p108
      %p110 = scmp.ne.s32.totalorder %s96, %s97
      %p111 = scmp.eq.s32.totalorder %s21, 1
      %p112 = por %p110, %p111
      %p114 = scmp.ne.s32.totalorder %s97, %s113
      %p115 = scmp.eq.s32.totalorder %s21, 0
      %p116 = por %p114, %p115
      %p117 = scmp.le.s32.totalorder 1, %s15
      %p118 = scmp.lt.s32.totalorder %s15, 3
      %p119 = pnand %p117, %p118
      %p120 = pneg %p119
      // Predicated region
      $region9: #{tpu_custom_call.1} parent=5 // pred_check
        _
      $region10: #{tpu_custom_call.1} parent=5 // pred_check_branch
        %122 = sbr.rel (%p119) target = $region12
      $region11: #{tpu_custom_call.1} parent=5 // pred_region
        %s123 = ssub.s32 %s15, 1
        // Predicated region
        $region13: #{tpu_custom_call.1} parent=11 // pred_check
          %p124 = pneg %p62
        $region14: #{tpu_custom_call.1} parent=11 // pred_check_branch
          %126 = sbr.rel (%p124) target = $region16
        $region15: #{tpu_custom_call.1} parent=11 // pred_region
          _
        $region16: #{tpu_custom_call.1} parent=11 // pred_fallthru
          _
        // Predicated region
        $region17: #{tpu_custom_call.1} parent=11 // pred_check
          %p127 = pneg %p83
        $region18: #{tpu_custom_call.1} parent=11 // pred_check_branch
          %129 = sbr.rel (%p127) target = $region20
        $region19: #{tpu_custom_call.1} parent=11 // pred_region
          _
        $region20: #{tpu_custom_call.1} parent=11 // pred_fallthru
          _
      $region12: #{tpu_custom_call.1} parent=5 // pred_fallthru
        _
      %p130 = scmp.lt.s32.totalorder %s15, 2
      // Predicated region
      $region21: #{tpu_custom_call.1} parent=5 // pred_check
        %p131 = pneg %p130
      $region22: #{tpu_custom_call.1} parent=5 // pred_check_branch
        %133 = sbr.rel (%p131) target = $region24
      $region23: #{tpu_custom_call.1} parent=5 // pred_region
        // Predicated region
        $region25: #{tpu_custom_call.1} parent=23 // pred_check
          %p134 = pneg %p35
        $region26: #{tpu_custom_call.1} parent=23 // pred_check_branch
          %136 = sbr.rel (%p134) target = $region28
        $region27: #{tpu_custom_call.1} parent=23 // pred_region
          %s137 = sand.u32 %s25, 1
          %s138 = scalar_lea.sflag [#allocation3], %s137
          %s139 = sand.u32 %s25, 1
          %s140 = smul.addr %s139, 512
          %s141 = scalar_lea.vmem [#allocation2], %s140
          %s143 = ssub.s32 8192, 8192
          %144 = vsyncadd %s138, %s143
          %s145 = smul.addr %s15, 128
          %s146 = scalar_lea.hbm %s0, %s145
          %s147 = sshll.u32 %s141, 4
          %s148 = int_to_ptr.vmem [resolvable:$true] %s147
          %153 = dma.hbm_to_vmem [thread:$0]  %s146, 8192, %s148, %s138, 256, 128, 8
        $region28: #{tpu_custom_call.1} parent=23 // pred_fallthru
          _
      $region24: #{tpu_custom_call.1} parent=5 // pred_fallthru
        _
      %p154 = scmp.le.s32.totalorder 1, %s15
      %p155 = scmp.lt.s32.totalorder %s15, 3
      %p156 = pnand %p154, %p155
      %p157 = pneg %p156
      // Predicated region
      $region29: #{tpu_custom_call.1} parent=5 // pred_check
        _
      $region30: #{tpu_custom_call.1} parent=5 // pred_check_branch
        %159 = sbr.rel (%p156) target = $region32
      $region31: #{tpu_custom_call.1} parent=5 // pred_region
        %s160 = ssub.s32 %s15, 1
        %s161 = sand.u32 %s28, 1
        %s162 = scalar_lea.sflag [#allocation3], %s161
        %s163 = sand.u32 %s28, 1
        %s164 = smul.addr %s163, 512
        %s165 = scalar_lea.vmem [#allocation2], %s164
        // Predicated region
        $region33: #{tpu_custom_call.1} parent=31 // pred_check
          %p166 = pneg %p41
        $region34: #{tpu_custom_call.1} parent=31 // pred_check_branch
          %168 = sbr.rel (%p166) target = $region36
        $region35: #{tpu_custom_call.1} parent=31 // pred_region
          %169 = dma.done %s162, 8192
        $region36: #{tpu_custom_call.1} parent=31 // pred_fallthru
          _
        %s170 = sand.u32 %s28, 1
        %s171 = scalar_lea.sflag [#allocation3], %s170
        %s172 = sand.u32 %s28, 1
        %s173 = smul.addr %s172, 512
        %s174 = scalar_lea.vmem [#allocation2], %s173
        %p175 = pneg %p41
        %p176 = pneg %p38
        %p177 = pneg %p62
        %p178 = pneg %p59
        %p179 = pneg %p83
        %p180 = pneg %p80
        %p181 = pneg %p109
        %p182 = pneg %p106
        %s183 = sand.u32 %s96, 1
        %s184 = scalar_lea.sflag [#allocation4], %s183
        %s185 = sand.u32 %s96, 1
        %s186 = smul.addr %s185, 512
        %s187 = scalar_lea.vmem [#allocation5], %s186
        %v188 = vld [vmem:[%s1] sm:$0xff]
        %v189 = vld [vmem:[%s1 + $0x8] sm:$0xff]
        %v190 = vld [vmem:[%s1 + $0x10] sm:$0xff]
        %v191 = vld [vmem:[%s1 + $0x18] sm:$0xff]
        %v192 = vld [vmem:[%s1 + $0x20] sm:$0xff]
        %v193 = vld [vmem:[%s1 + $0x28] sm:$0xff]
        %v194 = vld [vmem:[%s1 + $0x30] sm:$0xff]
        %v195 = vld [vmem:[%s1 + $0x38] sm:$0xff]
        %v196 = vld [vmem:[%s2] sm:$0xff]
        %v197 = vld [vmem:[%s2 + $0x8] sm:$0xff]
        %v198 = vld [vmem:[%s2 + $0x10] sm:$0xff]
        %v199 = vld [vmem:[%s2 + $0x18] sm:$0xff]
        %v200 = vld [vmem:[%s2 + $0x20] sm:$0xff]
        %v201 = vld [vmem:[%s2 + $0x28] sm:$0xff]
        %v202 = vld [vmem:[%s2 + $0x30] sm:$0xff]
        %v203 = vld [vmem:[%s2 + $0x38] sm:$0xff]
        %205 = vset.pattern.permute.xlu0 0
        %206 = vperm.xlu0 %205, %v196
        %v207 = vpop.permute.xlu0 %206
        %210 = vset.pattern.permute.xlu0 0
        %211 = vperm.xlu0 %210, %v197
        %v212 = vpop.permute.xlu0 %211
        %215 = vset.pattern.permute.xlu0 0
        %216 = vperm.xlu0 %215, %v198
        %v217 = vpop.permute.xlu0 %216
        %220 = vset.pattern.permute.xlu0 0
        %221 = vperm.xlu0 %220, %v199
        %v222 = vpop.permute.xlu0 %221
        %225 = vset.pattern.permute.xlu0 0
        %226 = vperm.xlu0 %225, %v200
        %v227 = vpop.permute.xlu0 %226
        %230 = vset.pattern.permute.xlu0 0
        %231 = vperm.xlu0 %230, %v201
        %v232 = vpop.permute.xlu0 %231
        %235 = vset.pattern.permute.xlu0 0
        %236 = vperm.xlu0 %235, %v202
        %v237 = vpop.permute.xlu0 %236
        %240 = vset.pattern.permute.xlu0 0
        %241 = vperm.xlu0 %240, %v203
        %v242 = vpop.permute.xlu0 %241
        %s244 = scalar_lea.vmem %s165, 64 [#allocation2]
        %v245 = vld [vmem:[%s244] sm:$0xff]
        %v246 = vld [vmem:[%s165 + $0x10] sm:$0xff]
        %v247 = vld [vmem:[%s165 + $0x18] sm:$0xff]
        %v248 = vld [vmem:[%s165 + $0x20] sm:$0xff]
        %v249 = vld [vmem:[%s165 + $0x28] sm:$0xff]
        %v250 = vld [vmem:[%s165 + $0x30] sm:$0xff]
        %v251 = vld [vmem:[%s165 + $0x38] sm:$0xff]
        %vm252 = vcmask 523264
        %v254 = vsel %vm252, %v188, 0
        %v257 = vsel %vm252, %v189, 0
        %v260 = vsel %vm252, %v190, 0
        %v263 = vsel %vm252, %v191, 0
        %v266 = vsel %vm252, %v192, 0
        %v269 = vsel %vm252, %v193, 0
        %v272 = vsel %vm252, %v194, 0
        %v275 = vsel %vm252, %v195, 0
        %277 = vmatprep.subr.mxu0 0.0
        %278 = vmatpush1.msra.mxu0 %v245
        %279 = vmatprep.subr.mxu0 0.0
        %280 = vmatpush1.msra.mxu0 0.0
        %281 = vmatprep.subr.mxu0 0.0
        %282 = vmatpush1.msra.mxu0 %v246
        %283 = vmatprep.subr.mxu0 0.0
        %284 = vmatpush1.msra.mxu0 %v247
        %285 = vmatprep.subr.mxu0 0.0
        %286 = vmatpush1.msra.mxu0 %v248
        %287 = vmatprep.subr.mxu0 0.0
        %288 = vmatpush1.msra.mxu0 %v249
        %289 = vmatprep.subr.mxu0 0.0
        %290 = vmatpush1.msra.mxu0 %v250
        %291 = vmatprep.subr.mxu0 0.0
        %292 = vmatpush1.msra.mxu0 %v251
        %293 = vmatprep.subr.mxu0 0.0
        %294 = vmatpush1.msra.mxu0 0.0
        %295 = vmatprep.subr.mxu0 0.0
        %296 = vmatpush1.msra.mxu0 0.0
        %297 = vmatprep.subr.mxu0 0.0
        %298 = vmatpush1.msra.mxu0 0.0
        %299 = vmatprep.subr.mxu0 0.0
        %300 = vmatpush1.msra.mxu0 0.0
        %301 = vmatprep.subr.mxu0 0.0
        %302 = vmatpush1.msra.mxu0 0.0
        %303 = vmatprep.subr.mxu0 0.0
        %304 = vmatpush1.msra.mxu0 0.0
        %305 = vmatprep.subr.mxu0 0.0
        %306 = vmatpush1.msra.mxu0 0.0
        %307 = vmatprep.subr.mxu0 0.0
        %308 = vmatpush1.msra.mxu0 0.0
        %309 = vmatprep.subr.mxu0 0.0
        %310 = vmatpush1.msra.mxu0 0.0
        %311 = vmatprep.subr.mxu0 0.0
        %312 = vmatpush1.msra.mxu0 0.0
        %313 = vmatprep.subr.mxu0 0.0
        %314 = vmatpush1.msra.mxu0 0.0
        %315 = vmatprep.subr.mxu0 0.0
        %316 = vmatpush1.msra.mxu0 0.0
        %317 = vmatprep.subr.mxu0 0.0
        %318 = vmatpush1.msra.mxu0 0.0
        %319 = vmatprep.subr.mxu0 0.0
        %320 = vmatpush1.msra.mxu0 0.0
        %321 = vmatprep.subr.mxu0 0.0
        %322 = vmatpush1.msra.mxu0 0.0
        %323 = vmatprep.subr.mxu0 0.0
        %324 = vmatpush1.msra.mxu0 0.0
        %325 = vmatprep.subr.mxu0 0.0
        %326 = vmatpush1.msra.mxu0 0.0
        %327 = vmatprep.subr.mxu0 0.0
        %328 = vmatpush1.msra.mxu0 0.0
        %329 = vmatprep.subr.mxu0 0.0
        %330 = vmatpush1.msra.mxu0 0.0
        %331 = vmatprep.subr.mxu0 0.0
        %332 = vmatpush1.msra.mxu0 0.0
        %333 = vmatprep.subr.mxu0 0.0
        %334 = vmatpush1.msra.mxu0 0.0
        %335 = vmatprep.subr.mxu0 0.0
        %336 = vmatpush1.msra.mxu0 0.0
        %337 = vmatprep.subr.mxu0 0.0
        %338 = vmatpush1.msra.mxu0 0.0
        %339 = vmatprep.subr.mxu0 0.0
        %340 = vmatpush1.msra.mxu0 0.0
        %341 = vmatprep.mubr.f32.mxu0 0.0
        %342 = vmatmul.mubr.f32.gmra.mrb[0].mxu0 %v254
        %v343 = vpop.f32.mrb[0].mxu0
        %v344 = vadd.f32 %v207, %v343
        %v345 = vpop.f32.mrb[0].mxu0
        %346 = vmatprep.mubr.f32.mxu0 0.0
        %347 = vmatmul.mubr.f32.gmra.mrb[0].mxu0 %v257
        %v348 = vpop.f32.mrb[0].mxu0
        %v349 = vadd.f32 %v212, %v348
        %v350 = vpop.f32.mrb[0].mxu0
        %351 = vmatprep.mubr.f32.mxu0 0.0
        %352 = vmatmul.mubr.f32.gmra.mrb[0].mxu0 %v260
        %v353 = vpop.f32.mrb[0].mxu0
        %v354 = vadd.f32 %v217, %v353
        %v355 = vpop.f32.mrb[0].mxu0
        %356 = vmatprep.mubr.f32.mxu0 0.0
        %357 = vmatmul.mubr.f32.gmra.mrb[0].mxu0 %v263
        %v358 = vpop.f32.mrb[0].mxu0
        %v359 = vadd.f32 %v222, %v358
        %v360 = vpop.f32.mrb[0].mxu0
        %361 = vmatprep.mubr.f32.mxu0 0.0
        %362 = vmatmul.mubr.f32.gmra.mrb[0].mxu0 %v266
        %v363 = vpop.f32.mrb[0].mxu0
        %v364 = vadd.f32 %v227, %v363
        %v365 = vpop.f32.mrb[0].mxu0
        %366 = vmatprep.mubr.f32.mxu0 0.0
        %367 = vmatmul.mubr.f32.gmra.mrb[0].mxu0 %v269
        %v368 = vpop.f32.mrb[0].mxu0
        %v369 = vadd.f32 %v232, %v368
        %v370 = vpop.f32.mrb[0].mxu0
        %371 = vmatprep.mubr.f32.mxu0 0.0
        %372 = vmatmul.mubr.f32.gmra.mrb[0].mxu0 %v272
        %v373 = vpop.f32.mrb[0].mxu0
        %v374 = vadd.f32 %v237, %v373
        %v375 = vpop.f32.mrb[0].mxu0
        %376 = vmatprep.mubr.f32.mxu0 0.0
        %377 = vmatmul.mubr.f32.gmra.mrb[0].mxu0 %v275
        %v378 = vpop.f32.mrb[0].mxu0
        %v379 = vadd.f32 %v242, %v378
        %v380 = vpop.f32.mrb[0].mxu0
        %381 = vdwg.mxu0
        %382 = vst [vmem:[%s187] sm:$0xff] %v344
        %383 = vst [vmem:[%s187 + $0x8] sm:$0xff] %v349
        %384 = vst [vmem:[%s187 + $0x10] sm:$0xff] %v354
        %385 = vst [vmem:[%s187 + $0x18] sm:$0xff] %v359
        %386 = vst [vmem:[%s187 + $0x20] sm:$0xff] %v364
        %387 = vst [vmem:[%s187 + $0x28] sm:$0xff] %v369
        %388 = vst [vmem:[%s187 + $0x30] sm:$0xff] %v374
        %389 = vst [vmem:[%s187 + $0x38] sm:$0xff] %v379
        %s390 = scalar_lea.vmem %s165, 128 [#allocation2]
        %v391 = vld [vmem:[%s390] sm:$0xff]
        %v392 = vld [vmem:[%s165 + $0x8] sm:$0xff]
        %v393 = vld [vmem:[%s244 + $0x10] sm:$0xff]
        %v394 = vld [vmem:[%s244 + $0x18] sm:$0xff]
        %v395 = vld [vmem:[%s244 + $0x20] sm:$0xff]
        %v396 = vld [vmem:[%s244 + $0x28] sm:$0xff]
        %v397 = vld [vmem:[%s244 + $0x30] sm:$0xff]
        %v398 = vld [vmem:[%s244 + $0x38] sm:$0xff]
        %399 = vmatprep.subr.mxu0 0.0
        %400 = vmatpush1.msra.mxu0 %v391
        %401 = vmatprep.subr.mxu0 0.0
        %402 = vmatpush1.msra.mxu0 %v392
        %403 = vmatprep.subr.mxu0 0.0
        %404 = vmatpush1.msra.mxu0 %v393
        %405 = vmatprep.subr.mxu0 0.0
        %406 = vmatpush1.msra.mxu0 %v394
        %407 = vmatprep.subr.mxu0 0.0
        %408 = vmatpush1.msra.mxu0 %v395
        %409 = vmatprep.subr.mxu0 0.0
        %410 = vmatpush1.msra.mxu0 %v396
        %411 = vmatprep.subr.mxu0 0.0
        %412 = vmatpush1.msra.mxu0 %v397
        %413 = vmatprep.subr.mxu0 0.0
        %414 = vmatpush1.msra.mxu0 %v398
        %415 = vmatprep.subr.mxu0 0.0
        %416 = vmatpush1.msra.mxu0 0.0
        %417 = vmatprep.subr.mxu0 0.0
        %418 = vmatpush1.msra.mxu0 0.0
        %419 = vmatprep.subr.mxu0 0.0
        %420 = vmatpush1.msra.mxu0 0.0
        %421 = vmatprep.subr.mxu0 0.0
        %422 = vmatpush1.msra.mxu0 0.0
        %423 = vmatprep.subr.mxu0 0.0
        %424 = vmatpush1.msra.mxu0 0.0
        %425 = vmatprep.subr.mxu0 0.0
        %426 = vmatpush1.msra.mxu0 0.0
        %427 = vmatprep.subr.mxu0 0.0
        %428 = vmatpush1.msra.mxu0 0.0
        %429 = vmatprep.subr.mxu0 0.0
        %430 = vmatpush1.msra.mxu0 0.0
        %431 = vmatprep.subr.mxu0 0.0
        %432 = vmatpush1.msra.mxu0 0.0
        %433 = vmatprep.subr.mxu0 0.0
        %434 = vmatpush1.msra.mxu0 0.0
        %435 = vmatprep.subr.mxu0 0.0
        %436 = vmatpush1.msra.mxu0 0.0
        %437 = vmatprep.subr.mxu0 0.0
        %438 = vmatpush1.msra.mxu0 0.0
        %439 = vmatprep.subr.mxu0 0.0
        %440 = vmatpush1.msra.mxu0 0.0
        %441 = vmatprep.subr.mxu0 0.0
        %442 = vmatpush1.msra.mxu0 0.0
        %443 = vmatprep.subr.mxu0 0.0
        %444 = vmatpush1.msra.mxu0 0.0
        %445 = vmatprep.subr.mxu0 0.0
        %446 = vmatpush1.msra.mxu0 0.0
        %447 = vmatprep.subr.mxu0 0.0
        %448 = vmatpush1.msra.mxu0 0.0
        %449 = vmatprep.subr.mxu0 0.0
        %450 = vmatpush1.msra.mxu0 0.0
        %451 = vmatprep.subr.mxu0 0.0
        %452 = vmatpush1.msra.mxu0 0.0
        %453 = vmatprep.subr.mxu0 0.0
        %454 = vmatpush1.msra.mxu0 0.0
        %455 = vmatprep.subr.mxu0 0.0
        %456 = vmatpush1.msra.mxu0 0.0
        %457 = vmatprep.subr.mxu0 0.0
        %458 = vmatpush1.msra.mxu0 0.0
        %459 = vmatprep.subr.mxu0 0.0
        %460 = vmatpush1.msra.mxu0 0.0
        %461 = vmatprep.subr.mxu0 0.0
        %462 = vmatpush1.msra.mxu0 0.0
        %463 = vmatprep.mubr.f32.mxu0 0.0
        %464 = vmatmul.mubr.f32.gmra.mrb[0].mxu0 %v254
        %v465 = vpop.f32.mrb[0].mxu0
        %v466 = vadd.f32 %v207, %v465
        %v467 = vpop.f32.mrb[0].mxu0
        %468 = vmatprep.mubr.f32.mxu0 0.0
        %469 = vmatmul.mubr.f32.gmra.mrb[0].mxu0 %v257
        %v470 = vpop.f32.mrb[0].mxu0
        %v471 = vadd.f32 %v212, %v470
        %v472 = vpop.f32.mrb[0].mxu0
        %473 = vmatprep.mubr.f32.mxu0 0.0
        %474 = vmatmul.mubr.f32.gmra.mrb[0].mxu0 %v260
        %v475 = vpop.f32.mrb[0].mxu0
        %v476 = vadd.f32 %v217, %v475
        %v477 = vpop.f32.mrb[0].mxu0
        %478 = vmatprep.mubr.f32.mxu0 0.0
        %479 = vmatmul.mubr.f32.gmra.mrb[0].mxu0 %v263
        %v480 = vpop.f32.mrb[0].mxu0
        %v481 = vadd.f32 %v222, %v480
        %v482 = vpop.f32.mrb[0].mxu0
        %483 = vmatprep.mubr.f32.mxu0 0.0
        %484 = vmatmul.mubr.f32.gmra.mrb[0].mxu0 %v266
        %v485 = vpop.f32.mrb[0].mxu0
        %v486 = vadd.f32 %v227, %v485
        %v487 = vpop.f32.mrb[0].mxu0
        %488 = vmatprep.mubr.f32.mxu0 0.0
        %489 = vmatmul.mubr.f32.gmra.mrb[0].mxu0 %v269
        %v490 = vpop.f32.mrb[0].mxu0
        %v491 = vadd.f32 %v232, %v490
        %v492 = vpop.f32.mrb[0].mxu0
        %493 = vmatprep.mubr.f32.mxu0 0.0
        %494 = vmatmul.mubr.f32.gmra.mrb[0].mxu0 %v272
        %v495 = vpop.f32.mrb[0].mxu0
        %v496 = vadd.f32 %v237, %v495
        %v497 = vpop.f32.mrb[0].mxu0
        %498 = vmatprep.mubr.f32.mxu0 0.0
        %499 = vmatmul.mubr.f32.gmra.mrb[0].mxu0 %v275
        %v500 = vpop.f32.mrb[0].mxu0
        %v501 = vadd.f32 %v242, %v500
        %v502 = vpop.f32.mrb[0].mxu0
        %503 = vdwg.mxu0
        %s504 = scalar_lea.vmem %s187, 64 [#allocation5]
        %505 = vst [vmem:[%s504] sm:$0xff] %v466
        %506 = vst [vmem:[%s504 + $0x8] sm:$0xff] %v471
        %507 = vst [vmem:[%s504 + $0x10] sm:$0xff] %v476
        %508 = vst [vmem:[%s504 + $0x18] sm:$0xff] %v481
        %509 = vst [vmem:[%s504 + $0x20] sm:$0xff] %v486
        %510 = vst [vmem:[%s504 + $0x28] sm:$0xff] %v491
        %511 = vst [vmem:[%s504 + $0x30] sm:$0xff] %v496
        %512 = vst [vmem:[%s504 + $0x38] sm:$0xff] %v501
        %s513 = scalar_lea.vmem %s165, 192 [#allocation2]
        %v514 = vld [vmem:[%s513] sm:$0xff]
        %v515 = vld [vmem:[%s244 + $0x8] sm:$0xff]
        %v516 = vld [vmem:[%s390 + $0x10] sm:$0xff]
        %v517 = vld [vmem:[%s390 + $0x18] sm:$0xff]
        %v518 = vld [vmem:[%s390 + $0x20] sm:$0xff]
        %v519 = vld [vmem:[%s390 + $0x28] sm:$0xff]
        %v520 = vld [vmem:[%s390 + $0x30] sm:$0xff]
        %v521 = vld [vmem:[%s390 + $0x38] sm:$0xff]
        %522 = vmatprep.subr.mxu0 0.0
        %523 = vmatpush1.msra.mxu0 %v514
        %524 = vmatprep.subr.mxu0 0.0
        %525 = vmatpush1.msra.mxu0 %v515
        %526 = vmatprep.subr.mxu0 0.0
        %527 = vmatpush1.msra.mxu0 %v516
        %528 = vmatprep.subr.mxu0 0.0
        %529 = vmatpush1.msra.mxu0 %v517
        %530 = vmatprep.subr.mxu0 0.0
        %531 = vmatpush1.msra.mxu0 %v518
        %532 = vmatprep.subr.mxu0 0.0
        %533 = vmatpush1.msra.mxu0 %v519
        %534 = vmatprep.subr.mxu0 0.0
        %535 = vmatpush1.msra.mxu0 %v520
        %536 = vmatprep.subr.mxu0 0.0
        %537 = vmatpush1.msra.mxu0 %v521
        %538 = vmatprep.subr.mxu0 0.0
        %539 = vmatpush1.msra.mxu0 0.0
        %540 = vmatprep.subr.mxu0 0.0
        %541 = vmatpush1.msra.mxu0 0.0
        %542 = vmatprep.subr.mxu0 0.0
        %543 = vmatpush1.msra.mxu0 0.0
        %544 = vmatprep.subr.mxu0 0.0
        %545 = vmatpush1.msra.mxu0 0.0
        %546 = vmatprep.subr.mxu0 0.0
        %547 = vmatpush1.msra.mxu0 0.0
        %548 = vmatprep.subr.mxu0 0.0
        %549 = vmatpush1.msra.mxu0 0.0
        %550 = vmatprep.subr.mxu0 0.0
        %551 = vmatpush1.msra.mxu0 0.0
        %552 = vmatprep.subr.mxu0 0.0
        %553 = vmatpush1.msra.mxu0 0.0
        %554 = vmatprep.subr.mxu0 0.0
        %555 = vmatpush1.msra.mxu0 0.0
        %556 = vmatprep.subr.mxu0 0.0
        %557 = vmatpush1.msra.mxu0 0.0
        %558 = vmatprep.subr.mxu0 0.0
        %559 = vmatpush1.msra.mxu0 0.0
        %560 = vmatprep.subr.mxu0 0.0
        %561 = vmatpush1.msra.mxu0 0.0
        %562 = vmatprep.subr.mxu0 0.0
        %563 = vmatpush1.msra.mxu0 0.0
        %564 = vmatprep.subr.mxu0 0.0
        %565 = vmatpush1.msra.mxu0 0.0
        %566 = vmatprep.subr.mxu0 0.0
        %567 = vmatpush1.msra.mxu0 0.0
        %568 = vmatprep.subr.mxu0 0.0
        %569 = vmatpush1.msra.mxu0 0.0
        %570 = vmatprep.subr.mxu0 0.0
        %571 = vmatpush1.msra.mxu0 0.0
        %572 = vmatprep.subr.mxu0 0.0
        %573 = vmatpush1.msra.mxu0 0.0
        %574 = vmatprep.subr.mxu0 0.0
        %575 = vmatpush1.msra.mxu0 0.0
        %576 = vmatprep.subr.mxu0 0.0
        %577 = vmatpush1.msra.mxu0 0.0
        %578 = vmatprep.subr.mxu0 0.0
        %579 = vmatpush1.msra.mxu0 0.0
        %580 = vmatprep.subr.mxu0 0.0
        %581 = vmatpush1.msra.mxu0 0.0
        %582 = vmatprep.subr.mxu0 0.0
        %583 = vmatpush1.msra.mxu0 0.0
        %584 = vmatprep.subr.mxu0 0.0
        %585 = vmatpush1.msra.mxu0 0.0
        %586 = vmatprep.mubr.f32.mxu0 0.0
        %587 = vmatmul.mubr.f32.gmra.mrb[0].mxu0 %v254
        %v588 = vpop.f32.mrb[0].mxu0
        %v589 = vadd.f32 %v207, %v588
        %v590 = vpop.f32.mrb[0].mxu0
        %591 = vmatprep.mubr.f32.mxu0 0.0
        %592 = vmatmul.mubr.f32.gmra.mrb[0].mxu0 %v257
        %v593 = vpop.f32.mrb[0].mxu0
        %v594 = vadd.f32 %v212, %v593
        %v595 = vpop.f32.mrb[0].mxu0
        %596 = vmatprep.mubr.f32.mxu0 0.0
        %597 = vmatmul.mubr.f32.gmra.mrb[0].mxu0 %v260
        %v598 = vpop.f32.mrb[0].mxu0
        %v599 = vadd.f32 %v217, %v598
        %v600 = vpop.f32.mrb[0].mxu0
        %601 = vmatprep.mubr.f32.mxu0 0.0
        %602 = vmatmul.mubr.f32.gmra.mrb[0].mxu0 %v263
        %v603 = vpop.f32.mrb[0].mxu0
        %v604 = vadd.f32 %v222, %v603
        %v605 = vpop.f32.mrb[0].mxu0
        %606 = vmatprep.mubr.f32.mxu0 0.0
        %607 = vmatmul.mubr.f32.gmra.mrb[0].mxu0 %v266
        %v608 = vpop.f32.mrb[0].mxu0
        %v609 = vadd.f32 %v227, %v608
        %v610 = vpop.f32.mrb[0].mxu0
        %611 = vmatprep.mubr.f32.mxu0 0.0
        %612 = vmatmul.mubr.f32.gmra.mrb[0].mxu0 %v269
        %v613 = vpop.f32.mrb[0].mxu0
        %v614 = vadd.f32 %v232, %v613
        %v615 = vpop.f32.mrb[0].mxu0
        %616 = vmatprep.mubr.f32.mxu0 0.0
        %617 = vmatmul.mubr.f32.gmra.mrb[0].mxu0 %v272
        %v618 = vpop.f32.mrb[0].mxu0
        %v619 = vadd.f32 %v237, %v618
        %v620 = vpop.f32.mrb[0].mxu0
        %621 = vmatprep.mubr.f32.mxu0 0.0
        %622 = vmatmul.mubr.f32.gmra.mrb[0].mxu0 %v275
        %v623 = vpop.f32.mrb[0].mxu0
        %v624 = vadd.f32 %v242, %v623
        %v625 = vpop.f32.mrb[0].mxu0
        %626 = vdwg.mxu0
        %s627 = scalar_lea.vmem %s187, 128 [#allocation5]
        %628 = vst [vmem:[%s627] sm:$0xff] %v589
        %629 = vst [vmem:[%s627 + $0x8] sm:$0xff] %v594
        %630 = vst [vmem:[%s627 + $0x10] sm:$0xff] %v599
        %631 = vst [vmem:[%s627 + $0x18] sm:$0xff] %v604
        %632 = vst [vmem:[%s627 + $0x20] sm:$0xff] %v609
        %633 = vst [vmem:[%s627 + $0x28] sm:$0xff] %v614
        %634 = vst [vmem:[%s627 + $0x30] sm:$0xff] %v619
        %635 = vst [vmem:[%s627 + $0x38] sm:$0xff] %v624
        %s636 = scalar_lea.vmem %s165, 256 [#allocation2]
        %v637 = vld [vmem:[%s636] sm:$0xff]
        %v638 = vld [vmem:[%s390 + $0x8] sm:$0xff]
        %v639 = vld [vmem:[%s513 + $0x10] sm:$0xff]
        %v640 = vld [vmem:[%s513 + $0x18] sm:$0xff]
        %v641 = vld [vmem:[%s513 + $0x20] sm:$0xff]
        %v642 = vld [vmem:[%s513 + $0x28] sm:$0xff]
        %v643 = vld [vmem:[%s513 + $0x30] sm:$0xff]
        %v644 = vld [vmem:[%s513 + $0x38] sm:$0xff]
        %645 = vmatprep.subr.mxu0 0.0
        %646 = vmatpush1.msra.mxu0 %v637
        %647 = vmatprep.subr.mxu0 0.0
        %648 = vmatpush1.msra.mxu0 %v638
        %649 = vmatprep.subr.mxu0 0.0
        %650 = vmatpush1.msra.mxu0 %v639
        %651 = vmatprep.subr.mxu0 0.0
        %652 = vmatpush1.msra.mxu0 %v640
        %653 = vmatprep.subr.mxu0 0.0
        %654 = vmatpush1.msra.mxu0 %v641
        %655 = vmatprep.subr.mxu0 0.0
        %656 = vmatpush1.msra.mxu0 %v642
        %657 = vmatprep.subr.mxu0 0.0
        %658 = vmatpush1.msra.mxu0 %v643
        %659 = vmatprep.subr.mxu0 0.0
        %660 = vmatpush1.msra.mxu0 %v644
        %661 = vmatprep.subr.mxu0 0.0
        %662 = vmatpush1.msra.mxu0 0.0
        %663 = vmatprep.subr.mxu0 0.0
        %664 = vmatpush1.msra.mxu0 0.0
        %665 = vmatprep.subr.mxu0 0.0
        %666 = vmatpush1.msra.mxu0 0.0
        %667 = vmatprep.subr.mxu0 0.0
        %668 = vmatpush1.msra.mxu0 0.0
        %669 = vmatprep.subr.mxu0 0.0
        %670 = vmatpush1.msra.mxu0 0.0
        %671 = vmatprep.subr.mxu0 0.0
        %672 = vmatpush1.msra.mxu0 0.0
        %673 = vmatprep.subr.mxu0 0.0
        %674 = vmatpush1.msra.mxu0 0.0
        %675 = vmatprep.subr.mxu0 0.0
        %676 = vmatpush1.msra.mxu0 0.0
        %677 = vmatprep.subr.mxu0 0.0
        %678 = vmatpush1.msra.mxu0 0.0
        %679 = vmatprep.subr.mxu0 0.0
        %680 = vmatpush1.msra.mxu0 0.0
        %681 = vmatprep.subr.mxu0 0.0
        %682 = vmatpush1.msra.mxu0 0.0
        %683 = vmatprep.subr.mxu0 0.0
        %684 = vmatpush1.msra.mxu0 0.0
        %685 = vmatprep.subr.mxu0 0.0
        %686 = vmatpush1.msra.mxu0 0.0
        %687 = vmatprep.subr.mxu0 0.0
        %688 = vmatpush1.msra.mxu0 0.0
        %689 = vmatprep.subr.mxu0 0.0
        %690 = vmatpush1.msra.mxu0 0.0
        %691 = vmatprep.subr.mxu0 0.0
        %692 = vmatpush1.msra.mxu0 0.0
        %693 = vmatprep.subr.mxu0 0.0
        %694 = vmatpush1.msra.mxu0 0.0
        %695 = vmatprep.subr.mxu0 0.0
        %696 = vmatpush1.msra.mxu0 0.0
        %697 = vmatprep.subr.mxu0 0.0
        %698 = vmatpush1.msra.mxu0 0.0
        %699 = vmatprep.subr.mxu0 0.0
        %700 = vmatpush1.msra.mxu0 0.0
        %701 = vmatprep.subr.mxu0 0.0
        %702 = vmatpush1.msra.mxu0 0.0
        %703 = vmatprep.subr.mxu0 0.0
        %704 = vmatpush1.msra.mxu0 0.0
        %705 = vmatprep.subr.mxu0 0.0
        %706 = vmatpush1.msra.mxu0 0.0
        %707 = vmatprep.subr.mxu0 0.0
        %708 = vmatpush1.msra.mxu0 0.0
        %709 = vmatprep.mubr.f32.mxu0 0.0
        %710 = vmatmul.mubr.f32.gmra.mrb[0].mxu0 %v254
        %v711 = vpop.f32.mrb[0].mxu0
        %v712 = vadd.f32 %v207, %v711
        %v713 = vpop.f32.mrb[0].mxu0
        %714 = vmatprep.mubr.f32.mxu0 0.0
        %715 = vmatmul.mubr.f32.gmra.mrb[0].mxu0 %v257
        %v716 = vpop.f32.mrb[0].mxu0
        %v717 = vadd.f32 %v212, %v716
        %v718 = vpop.f32.mrb[0].mxu0
        %719 = vmatprep.mubr.f32.mxu0 0.0
        %720 = vmatmul.mubr.f32.gmra.mrb[0].mxu0 %v260
        %v721 = vpop.f32.mrb[0].mxu0
        %v722 = vadd.f32 %v217, %v721
        %v723 = vpop.f32.mrb[0].mxu0
        %724 = vmatprep.mubr.f32.mxu0 0.0
        %725 = vmatmul.mubr.f32.gmra.mrb[0].mxu0 %v263
        %v726 = vpop.f32.mrb[0].mxu0
        %v727 = vadd.f32 %v222, %v726
        %v728 = vpop.f32.mrb[0].mxu0
        %729 = vmatprep.mubr.f32.mxu0 0.0
        %730 = vmatmul.mubr.f32.gmra.mrb[0].mxu0 %v266
        %v731 = vpop.f32.mrb[0].mxu0
        %v732 = vadd.f32 %v227, %v731
        %v733 = vpop.f32.mrb[0].mxu0
        %734 = vmatprep.mubr.f32.mxu0 0.0
        %735 = vmatmul.mubr.f32.gmra.mrb[0].mxu0 %v269
        %v736 = vpop.f32.mrb[0].mxu0
        %v737 = vadd.f32 %v232, %v736
        %v738 = vpop.f32.mrb[0].mxu0
        %739 = vmatprep.mubr.f32.mxu0 0.0
        %740 = vmatmul.mubr.f32.gmra.mrb[0].mxu0 %v272
        %v741 = vpop.f32.mrb[0].mxu0
        %v742 = vadd.f32 %v237, %v741
        %v743 = vpop.f32.mrb[0].mxu0
        %744 = vmatprep.mubr.f32.mxu0 0.0
        %745 = vmatmul.mubr.f32.gmra.mrb[0].mxu0 %v275
        %v746 = vpop.f32.mrb[0].mxu0
        %v747 = vadd.f32 %v242, %v746
        %v748 = vpop.f32.mrb[0].mxu0
        %749 = vdwg.mxu0
        %s750 = scalar_lea.vmem %s187, 192 [#allocation5]
        %751 = vst [vmem:[%s750] sm:$0xff] %v712
        %752 = vst [vmem:[%s750 + $0x8] sm:$0xff] %v717
        %753 = vst [vmem:[%s750 + $0x10] sm:$0xff] %v722
        %754 = vst [vmem:[%s750 + $0x18] sm:$0xff] %v727
        %755 = vst [vmem:[%s750 + $0x20] sm:$0xff] %v732
        %756 = vst [vmem:[%s750 + $0x28] sm:$0xff] %v737
        %757 = vst [vmem:[%s750 + $0x30] sm:$0xff] %v742
        %758 = vst [vmem:[%s750 + $0x38] sm:$0xff] %v747
        %s759 = scalar_lea.vmem %s165, 320 [#allocation2]
        %v760 = vld [vmem:[%s759] sm:$0xff]
        %v761 = vld [vmem:[%s513 + $0x8] sm:$0xff]
        %v762 = vld [vmem:[%s636 + $0x10] sm:$0xff]
        %v763 = vld [vmem:[%s636 + $0x18] sm:$0xff]
        %v764 = vld [vmem:[%s636 + $0x20] sm:$0xff]
        %v765 = vld [vmem:[%s636 + $0x28] sm:$0xff]
        %v766 = vld [vmem:[%s636 + $0x30] sm:$0xff]
        %v767 = vld [vmem:[%s636 + $0x38] sm:$0xff]
        %768 = vmatprep.subr.mxu0 0.0
        %769 = vmatpush1.msra.mxu0 %v760
        %770 = vmatprep.subr.mxu0 0.0
        %771 = vmatpush1.msra.mxu0 %v761
        %772 = vmatprep.subr.mxu0 0.0
        %773 = vmatpush1.msra.mxu0 %v762
        %774 = vmatprep.subr.mxu0 0.0
        %775 = vmatpush1.msra.mxu0 %v763
        %776 = vmatprep.subr.mxu0 0.0
        %777 = vmatpush1.msra.mxu0 %v764
        %778 = vmatprep.subr.mxu0 0.0
        %779 = vmatpush1.msra.mxu0 %v765
        %780 = vmatprep.subr.mxu0 0.0
        %781 = vmatpush1.msra.mxu0 %v766
        %782 = vmatprep.subr.mxu0 0.0
        %783 = vmatpush1.msra.mxu0 %v767
        %784 = vmatprep.subr.mxu0 0.0
        %785 = vmatpush1.msra.mxu0 0.0
        %786 = vmatprep.subr.mxu0 0.0
        %787 = vmatpush1.msra.mxu0 0.0
        %788 = vmatprep.subr.mxu0 0.0
        %789 = vmatpush1.msra.mxu0 0.0
        %790 = vmatprep.subr.mxu0 0.0
        %791 = vmatpush1.msra.mxu0 0.0
        %792 = vmatprep.subr.mxu0 0.0
        %793 = vmatpush1.msra.mxu0 0.0
        %794 = vmatprep.subr.mxu0 0.0
        %795 = vmatpush1.msra.mxu0 0.0
        %796 = vmatprep.subr.mxu0 0.0
        %797 = vmatpush1.msra.mxu0 0.0
        %798 = vmatprep.subr.mxu0 0.0
        %799 = vmatpush1.msra.mxu0 0.0
        %800 = vmatprep.subr.mxu0 0.0
        %801 = vmatpush1.msra.mxu0 0.0
        %802 = vmatprep.subr.mxu0 0.0
        %803 = vmatpush1.msra.mxu0 0.0
        %804 = vmatprep.subr.mxu0 0.0
        %805 = vmatpush1.msra.mxu0 0.0
        %806 = vmatprep.subr.mxu0 0.0
        %807 = vmatpush1.msra.mxu0 0.0
        %808 = vmatprep.subr.mxu0 0.0
        %809 = vmatpush1.msra.mxu0 0.0
        %810 = vmatprep.subr.mxu0 0.0
        %811 = vmatpush1.msra.mxu0 0.0
        %812 = vmatprep.subr.mxu0 0.0
        %813 = vmatpush1.msra.mxu0 0.0
        %814 = vmatprep.subr.mxu0 0.0
        %815 = vmatpush1.msra.mxu0 0.0
        %816 = vmatprep.subr.mxu0 0.0
        %817 = vmatpush1.msra.mxu0 0.0
        %818 = vmatprep.subr.mxu0 0.0
        %819 = vmatpush1.msra.mxu0 0.0
        %820 = vmatprep.subr.mxu0 0.0
        %821 = vmatpush1.msra.mxu0 0.0
        %822 = vmatprep.subr.mxu0 0.0
        %823 = vmatpush1.msra.mxu0 0.0
        %824 = vmatprep.subr.mxu0 0.0
        %825 = vmatpush1.msra.mxu0 0.0
        %826 = vmatprep.subr.mxu0 0.0
        %827 = vmatpush1.msra.mxu0 0.0
        %828 = vmatprep.subr.mxu0 0.0
        %829 = vmatpush1.msra.mxu0 0.0
        %830 = vmatprep.subr.mxu0 0.0
        %831 = vmatpush1.msra.mxu0 0.0
        %832 = vmatprep.mubr.f32.mxu0 0.0
        %833 = vmatmul.mubr.f32.gmra.mrb[0].mxu0 %v254
        %v834 = vpop.f32.mrb[0].mxu0
        %v835 = vadd.f32 %v207, %v834
        %v836 = vpop.f32.mrb[0].mxu0
        %837 = vmatprep.mubr.f32.mxu0 0.0
        %838 = vmatmul.mubr.f32.gmra.mrb[0].mxu0 %v257
        %v839 = vpop.f32.mrb[0].mxu0
        %v840 = vadd.f32 %v212, %v839
        %v841 = vpop.f32.mrb[0].mxu0
        %842 = vmatprep.mubr.f32.mxu0 0.0
        %843 = vmatmul.mubr.f32.gmra.mrb[0].mxu0 %v260
        %v844 = vpop.f32.mrb[0].mxu0
        %v845 = vadd.f32 %v217, %v844
        %v846 = vpop.f32.mrb[0].mxu0
        %847 = vmatprep.mubr.f32.mxu0 0.0
        %848 = vmatmul.mubr.f32.gmra.mrb[0].mxu0 %v263
        %v849 = vpop.f32.mrb[0].mxu0
        %v850 = vadd.f32 %v222, %v849
        %v851 = vpop.f32.mrb[0].mxu0
        %852 = vmatprep.mubr.f32.mxu0 0.0
        %853 = vmatmul.mubr.f32.gmra.mrb[0].mxu0 %v266
        %v854 = vpop.f32.mrb[0].mxu0
        %v855 = vadd.f32 %v227, %v854
        %v856 = vpop.f32.mrb[0].mxu0
        %857 = vmatprep.mubr.f32.mxu0 0.0
        %858 = vmatmul.mubr.f32.gmra.mrb[0].mxu0 %v269
        %v859 = vpop.f32.mrb[0].mxu0
        %v860 = vadd.f32 %v232, %v859
        %v861 = vpop.f32.mrb[0].mxu0
        %862 = vmatprep.mubr.f32.mxu0 0.0
        %863 = vmatmul.mubr.f32.gmra.mrb[0].mxu0 %v272
        %v864 = vpop.f32.mrb[0].mxu0
        %v865 = vadd.f32 %v237, %v864
        %v866 = vpop.f32.mrb[0].mxu0
        %867 = vmatprep.mubr.f32.mxu0 0.0
        %868 = vmatmul.mubr.f32.gmra.mrb[0].mxu0 %v275
        %v869 = vpop.f32.mrb[0].mxu0
        %v870 = vadd.f32 %v242, %v869
        %v871 = vpop.f32.mrb[0].mxu0
        %872 = vdwg.mxu0
        %s873 = scalar_lea.vmem %s187, 256 [#allocation5]
        %874 = vst [vmem:[%s873] sm:$0xff] %v835
        %875 = vst [vmem:[%s873 + $0x8] sm:$0xff] %v840
        %876 = vst [vmem:[%s873 + $0x10] sm:$0xff] %v845
        %877 = vst [vmem:[%s873 + $0x18] sm:$0xff] %v850
        %878 = vst [vmem:[%s873 + $0x20] sm:$0xff] %v855
        %879 = vst [vmem:[%s873 + $0x28] sm:$0xff] %v860
        %880 = vst [vmem:[%s873 + $0x30] sm:$0xff] %v865
        %881 = vst [vmem:[%s873 + $0x38] sm:$0xff] %v870
        %s882 = scalar_lea.vmem %s165, 384 [#allocation2]
        %v883 = vld [vmem:[%s882] sm:$0xff]
        %v884 = vld [vmem:[%s636 + $0x8] sm:$0xff]
        %v885 = vld [vmem:[%s759 + $0x10] sm:$0xff]
        %v886 = vld [vmem:[%s759 + $0x18] sm:$0xff]
        %v887 = vld [vmem:[%s759 + $0x20] sm:$0xff]
        %v888 = vld [vmem:[%s759 + $0x28] sm:$0xff]
        %v889 = vld [vmem:[%s759 + $0x30] sm:$0xff]
        %v890 = vld [vmem:[%s759 + $0x38] sm:$0xff]
        %891 = vmatprep.subr.mxu0 0.0
        %892 = vmatpush1.msra.mxu0 %v883
        %893 = vmatprep.subr.mxu0 0.0
        %894 = vmatpush1.msra.mxu0 %v884
        %895 = vmatprep.subr.mxu0 0.0
        %896 = vmatpush1.msra.mxu0 %v885
        %897 = vmatprep.subr.mxu0 0.0
        %898 = vmatpush1.msra.mxu0 %v886
        %899 = vmatprep.subr.mxu0 0.0
        %900 = vmatpush1.msra.mxu0 %v887
        %901 = vmatprep.subr.mxu0 0.0
        %902 = vmatpush1.msra.mxu0 %v888
        %903 = vmatprep.subr.mxu0 0.0
        %904 = vmatpush1.msra.mxu0 %v889
        %905 = vmatprep.subr.mxu0 0.0
        %906 = vmatpush1.msra.mxu0 %v890
        %907 = vmatprep.subr.mxu0 0.0
        %908 = vmatpush1.msra.mxu0 0.0
        %909 = vmatprep.subr.mxu0 0.0
        %910 = vmatpush1.msra.mxu0 0.0
        %911 = vmatprep.subr.mxu0 0.0
        %912 = vmatpush1.msra.mxu0 0.0
        %913 = vmatprep.subr.mxu0 0.0
        %914 = vmatpush1.msra.mxu0 0.0
        %915 = vmatprep.subr.mxu0 0.0
        %916 = vmatpush1.msra.mxu0 0.0
        %917 = vmatprep.subr.mxu0 0.0
        %918 = vmatpush1.msra.mxu0 0.0
        %919 = vmatprep.subr.mxu0 0.0
        %920 = vmatpush1.msra.mxu0 0.0
        %921 = vmatprep.subr.mxu0 0.0
        %922 = vmatpush1.msra.mxu0 0.0
        %923 = vmatprep.subr.mxu0 0.0
        %924 = vmatpush1.msra.mxu0 0.0
        %925 = vmatprep.subr.mxu0 0.0
        %926 = vmatpush1.msra.mxu0 0.0
        %927 = vmatprep.subr.mxu0 0.0
        %928 = vmatpush1.msra.mxu0 0.0
        %929 = vmatprep.subr.mxu0 0.0
        %930 = vmatpush1.msra.mxu0 0.0
        %931 = vmatprep.subr.mxu0 0.0
        %932 = vmatpush1.msra.mxu0 0.0
        %933 = vmatprep.subr.mxu0 0.0
        %934 = vmatpush1.msra.mxu0 0.0
        %935 = vmatprep.subr.mxu0 0.0
        %936 = vmatpush1.msra.mxu0 0.0
        %937 = vmatprep.subr.mxu0 0.0
        %938 = vmatpush1.msra.mxu0 0.0
        %939 = vmatprep.subr.mxu0 0.0
        %940 = vmatpush1.msra.mxu0 0.0
        %941 = vmatprep.subr.mxu0 0.0
        %942 = vmatpush1.msra.mxu0 0.0
        %943 = vmatprep.subr.mxu0 0.0
        %944 = vmatpush1.msra.mxu0 0.0
        %945 = vmatprep.subr.mxu0 0.0
        %946 = vmatpush1.msra.mxu0 0.0
        %947 = vmatprep.subr.mxu0 0.0
        %948 = vmatpush1.msra.mxu0 0.0
        %949 = vmatprep.subr.mxu0 0.0
        %950 = vmatpush1.msra.mxu0 0.0
        %951 = vmatprep.subr.mxu0 0.0
        %952 = vmatpush1.msra.mxu0 0.0
        %953 = vmatprep.subr.mxu0 0.0
        %954 = vmatpush1.msra.mxu0 0.0
        %955 = vmatprep.mubr.f32.mxu0 0.0
        %956 = vmatmul.mubr.f32.gmra.mrb[0].mxu0 %v254
        %v957 = vpop.f32.mrb[0].mxu0
        %v958 = vadd.f32 %v207, %v957
        %v959 = vpop.f32.mrb[0].mxu0
        %960 = vmatprep.mubr.f32.mxu0 0.0
        %961 = vmatmul.mubr.f32.gmra.mrb[0].mxu0 %v257
        %v962 = vpop.f32.mrb[0].mxu0
        %v963 = vadd.f32 %v212, %v962
        %v964 = vpop.f32.mrb[0].mxu0
        %965 = vmatprep.mubr.f32.mxu0 0.0
        %966 = vmatmul.mubr.f32.gmra.mrb[0].mxu0 %v260
        %v967 = vpop.f32.mrb[0].mxu0
        %v968 = vadd.f32 %v217, %v967
        %v969 = vpop.f32.mrb[0].mxu0
        %970 = vmatprep.mubr.f32.mxu0 0.0
        %971 = vmatmul.mubr.f32.gmra.mrb[0].mxu0 %v263
        %v972 = vpop.f32.mrb[0].mxu0
        %v973 = vadd.f32 %v222, %v972
        %v974 = vpop.f32.mrb[0].mxu0
        %975 = vmatprep.mubr.f32.mxu0 0.0
        %976 = vmatmul.mubr.f32.gmra.mrb[0].mxu0 %v266
        %v977 = vpop.f32.mrb[0].mxu0
        %v978 = vadd.f32 %v227, %v977
        %v979 = vpop.f32.mrb[0].mxu0
        %980 = vmatprep.mubr.f32.mxu0 0.0
        %981 = vmatmul.mubr.f32.gmra.mrb[0].mxu0 %v269
        %v982 = vpop.f32.mrb[0].mxu0
        %v983 = vadd.f32 %v232, %v982
        %v984 = vpop.f32.mrb[0].mxu0
        %985 = vmatprep.mubr.f32.mxu0 0.0
        %986 = vmatmul.mubr.f32.gmra.mrb[0].mxu0 %v272
        %v987 = vpop.f32.mrb[0].mxu0
        %v988 = vadd.f32 %v237, %v987
        %v989 = vpop.f32.mrb[0].mxu0
        %990 = vmatprep.mubr.f32.mxu0 0.0
        %991 = vmatmul.mubr.f32.gmra.mrb[0].mxu0 %v275
        %v992 = vpop.f32.mrb[0].mxu0
        %v993 = vadd.f32 %v242, %v992
        %v994 = vpop.f32.mrb[0].mxu0
        %995 = vdwg.mxu0
        %s996 = scalar_lea.vmem %s187, 320 [#allocation5]
        %997 = vst [vmem:[%s996] sm:$0xff] %v958
        %998 = vst [vmem:[%s996 + $0x8] sm:$0xff] %v963
        %999 = vst [vmem:[%s996 + $0x10] sm:$0xff] %v968
        %1000 = vst [vmem:[%s996 + $0x18] sm:$0xff] %v973
        %1001 = vst [vmem:[%s996 + $0x20] sm:$0xff] %v978
        %1002 = vst [vmem:[%s996 + $0x28] sm:$0xff] %v983
        %1003 = vst [vmem:[%s996 + $0x30] sm:$0xff] %v988
        %1004 = vst [vmem:[%s996 + $0x38] sm:$0xff] %v993
        %s1005 = scalar_lea.vmem %s165, 448 [#allocation2]
        %v1006 = vld [vmem:[%s1005] sm:$0xff]
        %v1007 = vld [vmem:[%s759 + $0x8] sm:$0xff]
        %v1008 = vld [vmem:[%s882 + $0x10] sm:$0xff]
        %v1009 = vld [vmem:[%s882 + $0x18] sm:$0xff]
        %v1010 = vld [vmem:[%s882 + $0x20] sm:$0xff]
        %v1011 = vld [vmem:[%s882 + $0x28] sm:$0xff]
        %v1012 = vld [vmem:[%s882 + $0x30] sm:$0xff]
        %v1013 = vld [vmem:[%s882 + $0x38] sm:$0xff]
        %1014 = vmatprep.subr.mxu0 0.0
        %1015 = vmatpush1.msra.mxu0 %v1006
        %1016 = vmatprep.subr.mxu0 0.0
        %1017 = vmatpush1.msra.mxu0 %v1007
        %1018 = vmatprep.subr.mxu0 0.0
        %1019 = vmatpush1.msra.mxu0 %v1008
        %1020 = vmatprep.subr.mxu0 0.0
        %1021 = vmatpush1.msra.mxu0 %v1009
        %1022 = vmatprep.subr.mxu0 0.0
        %1023 = vmatpush1.msra.mxu0 %v1010
        %1024 = vmatprep.subr.mxu0 0.0
        %1025 = vmatpush1.msra.mxu0 %v1011
        %1026 = vmatprep.subr.mxu0 0.0
        %1027 = vmatpush1.msra.mxu0 %v1012
        %1028 = vmatprep.subr.mxu0 0.0
        %1029 = vmatpush1.msra.mxu0 %v1013
        %1030 = vmatprep.subr.mxu0 0.0
        %1031 = vmatpush1.msra.mxu0 0.0
        %1032 = vmatprep.subr.mxu0 0.0
        %1033 = vmatpush1.msra.mxu0 0.0
        %1034 = vmatprep.subr.mxu0 0.0
        %1035 = vmatpush1.msra.mxu0 0.0
        %1036 = vmatprep.subr.mxu0 0.0
        %1037 = vmatpush1.msra.mxu0 0.0
        %1038 = vmatprep.subr.mxu0 0.0
        %1039 = vmatpush1.msra.mxu0 0.0
        %1040 = vmatprep.subr.mxu0 0.0
        %1041 = vmatpush1.msra.mxu0 0.0
        %1042 = vmatprep.subr.mxu0 0.0
        %1043 = vmatpush1.msra.mxu0 0.0
        %1044 = vmatprep.subr.mxu0 0.0
        %1045 = vmatpush1.msra.mxu0 0.0
        %1046 = vmatprep.subr.mxu0 0.0
        %1047 = vmatpush1.msra.mxu0 0.0
        %1048 = vmatprep.subr.mxu0 0.0
        %1049 = vmatpush1.msra.mxu0 0.0
        %1050 = vmatprep.subr.mxu0 0.0
        %1051 = vmatpush1.msra.mxu0 0.0
        %1052 = vmatprep.subr.mxu0 0.0
        %1053 = vmatpush1.msra.mxu0 0.0
        %1054 = vmatprep.subr.mxu0 0.0
        %1055 = vmatpush1.msra.mxu0 0.0
        %1056 = vmatprep.subr.mxu0 0.0
        %1057 = vmatpush1.msra.mxu0 0.0
        %1058 = vmatprep.subr.mxu0 0.0
        %1059 = vmatpush1.msra.mxu0 0.0
        %1060 = vmatprep.subr.mxu0 0.0
        %1061 = vmatpush1.msra.mxu0 0.0
        %1062 = vmatprep.subr.mxu0 0.0
        %1063 = vmatpush1.msra.mxu0 0.0
        %1064 = vmatprep.subr.mxu0 0.0
        %1065 = vmatpush1.msra.mxu0 0.0
        %1066 = vmatprep.subr.mxu0 0.0
        %1067 = vmatpush1.msra.mxu0 0.0
        %1068 = vmatprep.subr.mxu0 0.0
        %1069 = vmatpush1.msra.mxu0 0.0
        %1070 = vmatprep.subr.mxu0 0.0
        %1071 = vmatpush1.msra.mxu0 0.0
        %1072 = vmatprep.subr.mxu0 0.0
        %1073 = vmatpush1.msra.mxu0 0.0
        %1074 = vmatprep.subr.mxu0 0.0
        %1075 = vmatpush1.msra.mxu0 0.0
        %1076 = vmatprep.subr.mxu0 0.0
        %1077 = vmatpush1.msra.mxu0 0.0
        %1078 = vmatprep.mubr.f32.mxu0 0.0
        %1079 = vmatmul.mubr.f32.gmra.mrb[0].mxu0 %v254
        %v1080 = vpop.f32.mrb[0].mxu0
        %v1081 = vadd.f32 %v207, %v1080
        %v1082 = vpop.f32.mrb[0].mxu0
        %1083 = vmatprep.mubr.f32.mxu0 0.0
        %1084 = vmatmul.mubr.f32.gmra.mrb[0].mxu0 %v257
        %v1085 = vpop.f32.mrb[0].mxu0
        %v1086 = vadd.f32 %v212, %v1085
        %v1087 = vpop.f32.mrb[0].mxu0
        %1088 = vmatprep.mubr.f32.mxu0 0.0
        %1089 = vmatmul.mubr.f32.gmra.mrb[0].mxu0 %v260
        %v1090 = vpop.f32.mrb[0].mxu0
        %v1091 = vadd.f32 %v217, %v1090
        %v1092 = vpop.f32.mrb[0].mxu0
        %1093 = vmatprep.mubr.f32.mxu0 0.0
        %1094 = vmatmul.mubr.f32.gmra.mrb[0].mxu0 %v263
        %v1095 = vpop.f32.mrb[0].mxu0
        %v1096 = vadd.f32 %v222, %v1095
        %v1097 = vpop.f32.mrb[0].mxu0
        %1098 = vmatprep.mubr.f32.mxu0 0.0
        %1099 = vmatmul.mubr.f32.gmra.mrb[0].mxu0 %v266
        %v1100 = vpop.f32.mrb[0].mxu0
        %v1101 = vadd.f32 %v227, %v1100
        %v1102 = vpop.f32.mrb[0].mxu0
        %1103 = vmatprep.mubr.f32.mxu0 0.0
        %1104 = vmatmul.mubr.f32.gmra.mrb[0].mxu0 %v269
        %v1105 = vpop.f32.mrb[0].mxu0
        %v1106 = vadd.f32 %v232, %v1105
        %v1107 = vpop.f32.mrb[0].mxu0
        %1108 = vmatprep.mubr.f32.mxu0 0.0
        %1109 = vmatmul.mubr.f32.gmra.mrb[0].mxu0 %v272
        %v1110 = vpop.f32.mrb[0].mxu0
        %v1111 = vadd.f32 %v237, %v1110
        %v1112 = vpop.f32.mrb[0].mxu0
        %1113 = vmatprep.mubr.f32.mxu0 0.0
        %1114 = vmatmul.mubr.f32.gmra.mrb[0].mxu0 %v275
        %v1115 = vpop.f32.mrb[0].mxu0
        %v1116 = vadd.f32 %v242, %v1115
        %v1117 = vpop.f32.mrb[0].mxu0
        %1118 = vdwg.mxu0
        %s1119 = scalar_lea.vmem %s187, 384 [#allocation5]
        %1120 = vst [vmem:[%s1119] sm:$0xff] %v1081
        %1121 = vst [vmem:[%s1119 + $0x8] sm:$0xff] %v1086
        %1122 = vst [vmem:[%s1119 + $0x10] sm:$0xff] %v1091
        %1123 = vst [vmem:[%s1119 + $0x18] sm:$0xff] %v1096
        %1124 = vst [vmem:[%s1119 + $0x20] sm:$0xff] %v1101
        %1125 = vst [vmem:[%s1119 + $0x28] sm:$0xff] %v1106
        %1126 = vst [vmem:[%s1119 + $0x30] sm:$0xff] %v1111
        %1127 = vst [vmem:[%s1119 + $0x38] sm:$0xff] %v1116
        %v1128 = vld [vmem:[%s882 + $0x8] sm:$0xff]
        %v1129 = vld [vmem:[%s1005 + $0x10] sm:$0xff]
        %v1130 = vld [vmem:[%s1005 + $0x18] sm:$0xff]
        %v1131 = vld [vmem:[%s1005 + $0x20] sm:$0xff]
        %v1132 = vld [vmem:[%s1005 + $0x28] sm:$0xff]
        %v1133 = vld [vmem:[%s1005 + $0x30] sm:$0xff]
        %v1134 = vld [vmem:[%s1005 + $0x38] sm:$0xff]
        %1135 = vmatprep.subr.mxu0 0.0
        %1136 = vmatpush1.msra.mxu0 0.0
        %1137 = vmatprep.subr.mxu0 0.0
        %1138 = vmatpush1.msra.mxu0 %v1128
        %1139 = vmatprep.subr.mxu0 0.0
        %1140 = vmatpush1.msra.mxu0 %v1129
        %1141 = vmatprep.subr.mxu0 0.0
        %1142 = vmatpush1.msra.mxu0 %v1130
        %1143 = vmatprep.subr.mxu0 0.0
        %1144 = vmatpush1.msra.mxu0 %v1131
        %1145 = vmatprep.subr.mxu0 0.0
        %1146 = vmatpush1.msra.mxu0 %v1132
        %1147 = vmatprep.subr.mxu0 0.0
        %1148 = vmatpush1.msra.mxu0 %v1133
        %1149 = vmatprep.subr.mxu0 0.0
        %1150 = vmatpush1.msra.mxu0 %v1134
        %1151 = vmatprep.subr.mxu0 0.0
        %1152 = vmatpush1.msra.mxu0 0.0
        %1153 = vmatprep.subr.mxu0 0.0
        %1154 = vmatpush1.msra.mxu0 0.0
        %1155 = vmatprep.subr.mxu0 0.0
        %1156 = vmatpush1.msra.mxu0 0.0
        %1157 = vmatprep.subr.mxu0 0.0
        %1158 = vmatpush1.msra.mxu0 0.0
        %1159 = vmatprep.subr.mxu0 0.0
        %1160 = vmatpush1.msra.mxu0 0.0
        %1161 = vmatprep.subr.mxu0 0.0
        %1162 = vmatpush1.msra.mxu0 0.0
        %1163 = vmatprep.subr.mxu0 0.0
        %1164 = vmatpush1.msra.mxu0 0.0
        %1165 = vmatprep.subr.mxu0 0.0
        %1166 = vmatpush1.msra.mxu0 0.0
        %1167 = vmatprep.subr.mxu0 0.0
        %1168 = vmatpush1.msra.mxu0 0.0
        %1169 = vmatprep.subr.mxu0 0.0
        %1170 = vmatpush1.msra.mxu0 0.0
        %1171 = vmatprep.subr.mxu0 0.0
        %1172 = vmatpush1.msra.mxu0 0.0
        %1173 = vmatprep.subr.mxu0 0.0
        %1174 = vmatpush1.msra.mxu0 0.0
        %1175 = vmatprep.subr.mxu0 0.0
        %1176 = vmatpush1.msra.mxu0 0.0
        %1177 = vmatprep.subr.mxu0 0.0
        %1178 = vmatpush1.msra.mxu0 0.0
        %1179 = vmatprep.subr.mxu0 0.0
        %1180 = vmatpush1.msra.mxu0 0.0
        %1181 = vmatprep.subr.mxu0 0.0
        %1182 = vmatpush1.msra.mxu0 0.0
        %1183 = vmatprep.subr.mxu0 0.0
        %1184 = vmatpush1.msra.mxu0 0.0
        %1185 = vmatprep.subr.mxu0 0.0
        %1186 = vmatpush1.msra.mxu0 0.0
        %1187 = vmatprep.subr.mxu0 0.0
        %1188 = vmatpush1.msra.mxu0 0.0
        %1189 = vmatprep.subr.mxu0 0.0
        %1190 = vmatpush1.msra.mxu0 0.0
        %1191 = vmatprep.subr.mxu0 0.0
        %1192 = vmatpush1.msra.mxu0 0.0
        %1193 = vmatprep.subr.mxu0 0.0
        %1194 = vmatpush1.msra.mxu0 0.0
        %1195 = vmatprep.subr.mxu0 0.0
        %1196 = vmatpush1.msra.mxu0 0.0
        %1197 = vmatprep.subr.mxu0 0.0
        %1198 = vmatpush1.msra.mxu0 0.0
        %1199 = vmatprep.mubr.f32.mxu0 0.0
        %1200 = vmatmul.mubr.f32.gmra.mrb[0].mxu0 %v254
        %v1201 = vpop.f32.mrb[0].mxu0
        %v1202 = vadd.f32 %v207, %v1201
        %v1203 = vpop.f32.mrb[0].mxu0
        %1204 = vmatprep.mubr.f32.mxu0 0.0
        %1205 = vmatmul.mubr.f32.gmra.mrb[0].mxu0 %v257
        %v1206 = vpop.f32.mrb[0].mxu0
        %v1207 = vadd.f32 %v212, %v1206
        %v1208 = vpop.f32.mrb[0].mxu0
        %1209 = vmatprep.mubr.f32.mxu0 0.0
        %1210 = vmatmul.mubr.f32.gmra.mrb[0].mxu0 %v260
        %v1211 = vpop.f32.mrb[0].mxu0
        %v1212 = vadd.f32 %v217, %v1211
        %v1213 = vpop.f32.mrb[0].mxu0
        %1214 = vmatprep.mubr.f32.mxu0 0.0
        %1215 = vmatmul.mubr.f32.gmra.mrb[0].mxu0 %v263
        %v1216 = vpop.f32.mrb[0].mxu0
        %v1217 = vadd.f32 %v222, %v1216
        %v1218 = vpop.f32.mrb[0].mxu0
        %1219 = vmatprep.mubr.f32.mxu0 0.0
        %1220 = vmatmul.mubr.f32.gmra.mrb[0].mxu0 %v266
        %v1221 = vpop.f32.mrb[0].mxu0
        %v1222 = vadd.f32 %v227, %v1221
        %v1223 = vpop.f32.mrb[0].mxu0
        %1224 = vmatprep.mubr.f32.mxu0 0.0
        %1225 = vmatmul.mubr.f32.gmra.mrb[0].mxu0 %v269
        %v1226 = vpop.f32.mrb[0].mxu0
        %v1227 = vadd.f32 %v232, %v1226
        %v1228 = vpop.f32.mrb[0].mxu0
        %1229 = vmatprep.mubr.f32.mxu0 0.0
        %1230 = vmatmul.mubr.f32.gmra.mrb[0].mxu0 %v272
        %v1231 = vpop.f32.mrb[0].mxu0
        %v1232 = vadd.f32 %v237, %v1231
        %v1233 = vpop.f32.mrb[0].mxu0
        %1234 = vmatprep.mubr.f32.mxu0 0.0
        %1235 = vmatmul.mubr.f32.gmra.mrb[0].mxu0 %v275
        %v1236 = vpop.f32.mrb[0].mxu0
        %v1237 = vadd.f32 %v242, %v1236
        %v1238 = vpop.f32.mrb[0].mxu0
        %1239 = vdwg.mxu0
        %s1240 = scalar_lea.vmem %s187, 448 [#allocation5]
        %1241 = vst [vmem:[%s1240] sm:$0xff] %v1202
        %1242 = vst [vmem:[%s1240 + $0x8] sm:$0xff] %v1207
        %1243 = vst [vmem:[%s1240 + $0x10] sm:$0xff] %v1212
        %1244 = vst [vmem:[%s1240 + $0x18] sm:$0xff] %v1217
        %1245 = vst [vmem:[%s1240 + $0x20] sm:$0xff] %v1222
        %1246 = vst [vmem:[%s1240 + $0x28] sm:$0xff] %v1227
        %1247 = vst [vmem:[%s1240 + $0x30] sm:$0xff] %v1232
        %1248 = vst [vmem:[%s1240 + $0x38] sm:$0xff] %v1237
        %s1249 = sand.u32 %s96, 1
        %s1250 = scalar_lea.sflag [#allocation4], %s1249
        %s1251 = sand.u32 %s96, 1
        %s1252 = smul.addr %s1251, 512
        %s1253 = scalar_lea.vmem [#allocation5], %s1252
        // Predicated region
        $region37: #{tpu_custom_call.1} parent=31 // pred_check
          %p1254 = pneg %p106
        $region38: #{tpu_custom_call.1} parent=31 // pred_check_branch
          %1256 = sbr.rel (%p1254) target = $region40
        $region39: #{tpu_custom_call.1} parent=31 // pred_region
          %s1258 = ssub.s32 8192, 8192
          %1259 = vsyncadd %s1250, %s1258
          %s1260 = smul.addr %s20, 128
          %s1261 = scalar_lea.hbm %s3, %s1260
          %s1262 = sshll.u32 %s1253, 4
          %s1263 = int_to_ptr.vmem [resolvable:$true] %s1262
          %1268 = dma.vmem_to_hbm [thread:$0]  %s1263, 8192, %s1261, %s1250, 128, 256, 8
        $region40: #{tpu_custom_call.1} parent=31 // pred_fallthru
          _
      $region32: #{tpu_custom_call.1} parent=5 // pred_fallthru
        _
      %p1269 = scmp.le.s32.totalorder 2, %s15
      // Predicated region
      $region41: #{tpu_custom_call.1} parent=5 // pred_check
        %p1270 = pneg %p1269
      $region42: #{tpu_custom_call.1} parent=5 // pred_check_branch
        %1272 = sbr.rel (%p1270) target = $region44
      $region43: #{tpu_custom_call.1} parent=5 // pred_region
        %s1273 = ssub.s32 %s15, 2
        // Predicated region
        $region45: #{tpu_custom_call.1} parent=43 // pred_check
          %p1274 = pneg %p112
        $region46: #{tpu_custom_call.1} parent=43 // pred_check_branch
          %1276 = sbr.rel (%p1274) target = $region48
        $region47: #{tpu_custom_call.1} parent=43 // pred_region
          %s1277 = sand.u32 %s97, 1
          %s1278 = scalar_lea.sflag [#allocation4], %s1277
          %s1279 = sand.u32 %s97, 1
          %s1280 = smul.addr %s1279, 512
          %s1281 = scalar_lea.vmem [#allocation5], %s1280
          %1282 = dma.done %s1278, 8192
        $region48: #{tpu_custom_call.1} parent=43 // pred_fallthru
          _
      $region44: #{tpu_custom_call.1} parent=5 // pred_fallthru
        _
    $region6: #{tpu_custom_call.1} parent=1 // loop_footer
      %s19 = sadd.s32 1, %s15
    $region7: #{tpu_custom_call.1} parent=1 // loop_footer_branch
      %14 = sbr.rel target = $region3
    $region8: #{tpu_custom_call.1} parent=1 // loop_exit
      _
    %1283 = vsyncpa [#allocation3], 1
    %s1284 = scalar_lea.sflag [#allocation3], 1
    %1285 = vsyncpa %s1284, 1
    %1286 = vsyncpa [#allocation4], 1
    %s1287 = scalar_lea.sflag [#allocation4], 1
    %1288 = vsyncpa %s1287, 1

</llo_original>
